<compile_context>
chip_gen: v7x
topology: tpu7x:2x2x1
jax: 0.10.0
libtpu: 0.0.40
codegen_flags: <defaults>
</compile_context>

<pallas_src>
import jax
import jax.numpy as jnp
from jax.experimental import pallas as pl
from jax.experimental.pallas import tpu as pltpu

_LAYER_DIMS = [(10, 48), (48, 48), (48, 48), (48, 48), (48, 21)]
_OUT_FEATURES = _LAYER_DIMS[-1][1]      # 21
_OUT_PAD = 128                          # lane-dense padded output width


def _generator_kernel(x_ref,
                      w1_ref, b1_ref,
                      w2_ref, b2_ref,
                      w3_ref, b3_ref,
                      w4_ref, b4_ref,
                      w5_ref, b5_ref,
                      o_ref):
    """One batch tile (TM rows) through the whole MLP. Weights stay in VMEM."""

    def dense(h, w_ref, b_ref):
        # bf16 operands on the MXU, explicit f32 accumulation, f32 bias add.
        return jnp.dot(h.astype(jnp.bfloat16), w_ref[...],
                       preferred_element_type=jnp.float32) + b_ref[...]

    h = x_ref[...]
    h = jnp.maximum(dense(h, w1_ref, b1_ref), 0.0)
    h = jnp.maximum(dense(h, w2_ref, b2_ref), 0.0)
    h = jnp.maximum(dense(h, w3_ref, b3_ref), 0.0)
    h = jnp.maximum(dense(h, w4_ref, b4_ref), 0.0)
    # Final layer (padded to 128 lanes): no activation, unmasked full-lane store.
    o_ref[...] = dense(h, w5_ref, b5_ref)


def _round_up(x, m):
    return ((x + m - 1) // m) * m


def generator_forward(noise, params, *, tm=256):
    """noise: (B, 10) float32 -> (B, 1, 21) float32 (== torch.unsqueeze(dense_g(noise), 1))."""
    B, F_in = noise.shape
    assert F_in == _LAYER_DIMS[0][0]

    # Flatten params; cast weights to bf16; pad the last layer to 128 lanes.
    flat_params = []
    for i, (w, b) in enumerate(params):
        if i == len(params) - 1:
            pad = _OUT_PAD - w.shape[1]
            w = jnp.pad(w, ((0, 0), (0, pad)))
            b = jnp.pad(b, ((0, 0), (0, pad)))
        flat_params.append(w.astype(jnp.bfloat16))
        flat_params.append(b.astype(jnp.float32))

    # Batch tile: big enough to fill the MXU M dimension, but no bigger than
    # the (8-aligned) batch itself for tiny test batches.
    tm_eff = min(tm, max(8, _round_up(B, 8)))
    B_pad = _round_up(B, tm_eff)
    noise_p = jnp.pad(noise.astype(jnp.float32), ((0, B_pad - B), (0, 0)))

    grid = (pl.cdiv(B_pad, tm_eff),)

    in_specs = [pl.BlockSpec((tm_eff, F_in), lambda i: (i, 0))]
    # Weights / biases: full blocks, constant index_map -> fetched once, VMEM-resident.
    for arr in flat_params:
        in_specs.append(pl.BlockSpec(arr.shape, lambda i: (0, 0)))

    out_spec = pl.BlockSpec((tm_eff, _OUT_PAD), lambda i: (i, 0))

    latent_pad = pl.pallas_call(
        _generator_kernel,
        out_shape=jax.ShapeDtypeStruct((B_pad, _OUT_PAD), jnp.float32),
        grid=grid,
        in_specs=in_specs,
        out_specs=out_spec,
        compiler_params=pltpu.CompilerParams(
            dimension_semantics=("parallel",)),
    )(noise_p, *flat_params)

    # Drop batch padding, drop the 107 zero lanes, then torch.unsqueeze(latent, 1).
    latent = latent_pad[:B, :_OUT_FEATURES]
    return latent[:, None, :]


def init_params(key):
    """nn.Linear-style init: uniform(-1/sqrt(fan_in), 1/sqrt(fan_in)) for W and b."""
    params = []
    for (fan_in, fan_out) in _LAYER_DIMS:
        key, kw, kb = jax.random.split(key, 3)
        bound = 1.0 / jnp.sqrt(fan_in)
        w = jax.random.uniform(kw, (fan_in, fan_out), jnp.float32, -bound, bound)
        b = jax.random.uniform(kb, (1, fan_out), jnp.float32, -bound, bound)
        params.append((w, b))
    return params


def reference_forward(noise, params):
    """Plain-JAX reference following the same bf16-matmul / f32-accumulate path."""
    h = noise.astype(jnp.float32)
    for i, (w, b) in enumerate(params):
        h = jnp.dot(h.astype(jnp.bfloat16), w.astype(jnp.bfloat16),
                    preferred_element_type=jnp.float32) + b
        if i < len(params) - 1:
            h = jnp.maximum(h, 0.0)
    return h[:, None, :]


def reference_forward_f32(noise, params):
    """Full-f32 reference (sanity bound for the bf16 cast)."""
    h = noise
    for i, (w, b) in enumerate(params):
        h = h @ w + b
        if i < len(params) - 1:
            h = jnp.maximum(h, 0.0)
    return h[:, None, :]


if __name__ == "__main__":
    key = jax.random.PRNGKey(0)
    key, knoise = jax.random.split(key)

    B = 512  # two 256-row batch tiles -> exercises the grid + pipelining
    noise = jax.random.normal(knoise, (B, 10), dtype=jnp.float32)
    params = init_params(key)

    out = generator_forward(noise, params)
    out = jax.block_until_ready(out)

    assert out.shape == (B, 1, _OUT_FEATURES), out.shape

    ref_bf16 = reference_forward(noise, params)
    assert jnp.allclose(out, ref_bf16, atol=1e-3, rtol=1e-3), \
        "mismatch vs bf16-path reference"

    ref_f32 = reference_forward_f32(noise, params)
    assert jnp.allclose(out, ref_f32, atol=5e-2, rtol=5e-2), \
        "mismatch vs f32 reference beyond bf16 tolerance"

    print("KERNEL_OK")
</pallas_src>

<mosaic_0001>
module attributes {stable_mosaic.version = 11 : i64} {
  func.func @_generator_kernel(%arg0: i32, %arg1: memref<256x10xf32, #tpu.memory_space<vmem>>, %arg2: memref<10x48xbf16, #tpu.memory_space<vmem>>, %arg3: memref<1x48xf32, #tpu.memory_space<vmem>>, %arg4: memref<48x48xbf16, #tpu.memory_space<vmem>>, %arg5: memref<1x48xf32, #tpu.memory_space<vmem>>, %arg6: memref<48x48xbf16, #tpu.memory_space<vmem>>, %arg7: memref<1x48xf32, #tpu.memory_space<vmem>>, %arg8: memref<48x48xbf16, #tpu.memory_space<vmem>>, %arg9: memref<1x48xf32, #tpu.memory_space<vmem>>, %arg10: memref<48x128xbf16, #tpu.memory_space<vmem>>, %arg11: memref<1x128xf32, #tpu.memory_space<vmem>>, %arg12: memref<256x128xf32, #tpu.memory_space<vmem>>) attributes {dimension_semantics = [#tpu.dimension_semantics<parallel>], iteration_bounds = array<i64: 2>, scalar_prefetch = 0 : i64, scratch_operands = 0 : i64, tpu.core_type = #tpu.core_type<tc>, window_params = [{transform_indices = @transform_0, window_bounds = array<i64: 256, 10>}, {pipeline_mode = #tpu.pipeline_mode<synchronous>, transform_indices = @transform_1, window_bounds = array<i64: 10, 48>}, {pipeline_mode = #tpu.pipeline_mode<synchronous>, transform_indices = @transform_2, window_bounds = array<i64: 1, 48>}, {pipeline_mode = #tpu.pipeline_mode<synchronous>, transform_indices = @transform_3, window_bounds = array<i64: 48, 48>}, {pipeline_mode = #tpu.pipeline_mode<synchronous>, transform_indices = @transform_4, window_bounds = array<i64: 1, 48>}, {pipeline_mode = #tpu.pipeline_mode<synchronous>, transform_indices = @transform_5, window_bounds = array<i64: 48, 48>}, {pipeline_mode = #tpu.pipeline_mode<synchronous>, transform_indices = @transform_6, window_bounds = array<i64: 1, 48>}, {pipeline_mode = #tpu.pipeline_mode<synchronous>, transform_indices = @transform_7, window_bounds = array<i64: 48, 48>}, {pipeline_mode = #tpu.pipeline_mode<synchronous>, transform_indices = @transform_8, window_bounds = array<i64: 1, 48>}, {pipeline_mode = #tpu.pipeline_mode<synchronous>, transform_indices = @transform_9, window_bounds = array<i64: 48, 128>}, {pipeline_mode = #tpu.pipeline_mode<synchronous>, transform_indices = @transform_10, window_bounds = array<i64: 1, 128>}, {transform_indices = @transform_11, window_bounds = array<i64: 256, 128>}]} {
    %c0 = arith.constant 0 : index
    %c0_0 = arith.constant 0 : index
    %0 = vector.load %arg1[%c0, %c0_0] : memref<256x10xf32, #tpu.memory_space<vmem>>, vector<256x10xf32>
    %1 = arith.truncf %0 : vector<256x10xf32> to vector<256x10xbf16>
    %c0_1 = arith.constant 0 : index
    %c0_2 = arith.constant 0 : index
    %2 = vector.load %arg2[%c0_1, %c0_2] : memref<10x48xbf16, #tpu.memory_space<vmem>>, vector<10x48xbf16>
    %cst = arith.constant dense<0.000000e+00> : vector<256x48xf32>
    %3 = tpu.matmul %1, %2, %cst {dimension_numbers = #tpu.dot_dimension_numbers<[1], [0], [0], [1], [0, 0, 1, 1], [], []>} : vector<256x10xbf16>, vector<10x48xbf16>, vector<256x48xf32> -> vector<256x48xf32>
    %c0_3 = arith.constant 0 : index
    %c0_4 = arith.constant 0 : index
    %4 = vector.load %arg3[%c0_3, %c0_4] : memref<1x48xf32, #tpu.memory_space<vmem>>, vector<1x48xf32>
    %5 = vector.broadcast %4 : vector<1x48xf32> to vector<256x48xf32>
    %6 = arith.addf %3, %5 : vector<256x48xf32>
    %cst_5 = arith.constant 0.000000e+00 : f32
    %7 = vector.broadcast %cst_5 : f32 to vector<256x48xf32>
    %8 = arith.maximumf %6, %7 : vector<256x48xf32>
    %9 = arith.truncf %8 : vector<256x48xf32> to vector<256x48xbf16>
    %c0_6 = arith.constant 0 : index
    %c0_7 = arith.constant 0 : index
    %10 = vector.load %arg4[%c0_6, %c0_7] : memref<48x48xbf16, #tpu.memory_space<vmem>>, vector<48x48xbf16>
    %cst_8 = arith.constant dense<0.000000e+00> : vector<256x48xf32>
    %11 = tpu.matmul %9, %10, %cst_8 {dimension_numbers = #tpu.dot_dimension_numbers<[1], [0], [0], [1], [0, 0, 1, 1], [], []>} : vector<256x48xbf16>, vector<48x48xbf16>, vector<256x48xf32> -> vector<256x48xf32>
    %c0_9 = arith.constant 0 : index
    %c0_10 = arith.constant 0 : index
    %12 = vector.load %arg5[%c0_9, %c0_10] : memref<1x48xf32, #tpu.memory_space<vmem>>, vector<1x48xf32>
    %13 = vector.broadcast %12 : vector<1x48xf32> to vector<256x48xf32>
    %14 = arith.addf %11, %13 : vector<256x48xf32>
    %cst_11 = arith.constant 0.000000e+00 : f32
    %15 = vector.broadcast %cst_11 : f32 to vector<256x48xf32>
    %16 = arith.maximumf %14, %15 : vector<256x48xf32>
    %17 = arith.truncf %16 : vector<256x48xf32> to vector<256x48xbf16>
    %c0_12 = arith.constant 0 : index
    %c0_13 = arith.constant 0 : index
    %18 = vector.load %arg6[%c0_12, %c0_13] : memref<48x48xbf16, #tpu.memory_space<vmem>>, vector<48x48xbf16>
    %cst_14 = arith.constant dense<0.000000e+00> : vector<256x48xf32>
    %19 = tpu.matmul %17, %18, %cst_14 {dimension_numbers = #tpu.dot_dimension_numbers<[1], [0], [0], [1], [0, 0, 1, 1], [], []>} : vector<256x48xbf16>, vector<48x48xbf16>, vector<256x48xf32> -> vector<256x48xf32>
    %c0_15 = arith.constant 0 : index
    %c0_16 = arith.constant 0 : index
    %20 = vector.load %arg7[%c0_15, %c0_16] : memref<1x48xf32, #tpu.memory_space<vmem>>, vector<1x48xf32>
    %21 = vector.broadcast %20 : vector<1x48xf32> to vector<256x48xf32>
    %22 = arith.addf %19, %21 : vector<256x48xf32>
    %cst_17 = arith.constant 0.000000e+00 : f32
    %23 = vector.broadcast %cst_17 : f32 to vector<256x48xf32>
    %24 = arith.maximumf %22, %23 : vector<256x48xf32>
    %25 = arith.truncf %24 : vector<256x48xf32> to vector<256x48xbf16>
    %c0_18 = arith.constant 0 : index
    %c0_19 = arith.constant 0 : index
    %26 = vector.load %arg8[%c0_18, %c0_19] : memref<48x48xbf16, #tpu.memory_space<vmem>>, vector<48x48xbf16>
    %cst_20 = arith.constant dense<0.000000e+00> : vector<256x48xf32>
    %27 = tpu.matmul %25, %26, %cst_20 {dimension_numbers = #tpu.dot_dimension_numbers<[1], [0], [0], [1], [0, 0, 1, 1], [], []>} : vector<256x48xbf16>, vector<48x48xbf16>, vector<256x48xf32> -> vector<256x48xf32>
    %c0_21 = arith.constant 0 : index
    %c0_22 = arith.constant 0 : index
    %28 = vector.load %arg9[%c0_21, %c0_22] : memref<1x48xf32, #tpu.memory_space<vmem>>, vector<1x48xf32>
    %29 = vector.broadcast %28 : vector<1x48xf32> to vector<256x48xf32>
    %30 = arith.addf %27, %29 : vector<256x48xf32>
    %cst_23 = arith.constant 0.000000e+00 : f32
    %31 = vector.broadcast %cst_23 : f32 to vector<256x48xf32>
    %32 = arith.maximumf %30, %31 : vector<256x48xf32>
    %33 = arith.truncf %32 : vector<256x48xf32> to vector<256x48xbf16>
    %c0_24 = arith.constant 0 : index
    %c0_25 = arith.constant 0 : index
    %34 = vector.load %arg10[%c0_24, %c0_25] : memref<48x128xbf16, #tpu.memory_space<vmem>>, vector<48x128xbf16>
    %cst_26 = arith.constant dense<0.000000e+00> : vector<256x128xf32>
    %35 = tpu.matmul %33, %34, %cst_26 {dimension_numbers = #tpu.dot_dimension_numbers<[1], [0], [0], [1], [0, 0, 1, 1], [], []>} : vector<256x48xbf16>, vector<48x128xbf16>, vector<256x128xf32> -> vector<256x128xf32>
    %c0_27 = arith.constant 0 : index
    %c0_28 = arith.constant 0 : index
    %36 = vector.load %arg11[%c0_27, %c0_28] : memref<1x128xf32, #tpu.memory_space<vmem>>, vector<1x128xf32>
    %37 = vector.broadcast %36 : vector<1x128xf32> to vector<256x128xf32>
    %38 = arith.addf %35, %37 : vector<256x128xf32>
    %c0_29 = arith.constant 0 : index
    %c0_30 = arith.constant 0 : index
    %39 = vector.load %arg12[%c0_29, %c0_30] : memref<256x128xf32, #tpu.memory_space<vmem>>, vector<256x128xf32>
    tpu.vector_store %arg12[%c0_29, %c0_30], %38 {strides = array<i32>} : memref<256x128xf32, #tpu.memory_space<vmem>>, vector<256x128xf32>,
    return
  }
  func.func @transform_0(%arg0: i32) -> (i32, i32) {
    %c0_i32 = arith.constant 0 : i32
    %c0_i32_0 = arith.constant 0 : i32
    return %arg0, %c0_i32 : i32, i32
  }
  func.func @transform_1(%arg0: i32) -> (i32, i32) {
    %c0_i32 = arith.constant 0 : i32
    %c0_i32_0 = arith.constant 0 : i32
    %c0_i32_1 = arith.constant 0 : i32
    return %c0_i32, %c0_i32_0 : i32, i32
  }
  func.func @transform_2(%arg0: i32) -> (i32, i32) {
    %c0_i32 = arith.constant 0 : i32
    %c0_i32_0 = arith.constant 0 : i32
    %c0_i32_1 = arith.constant 0 : i32
    return %c0_i32, %c0_i32_0 : i32, i32
  }
  func.func @transform_3(%arg0: i32) -> (i32, i32) {
    %c0_i32 = arith.constant 0 : i32
    %c0_i32_0 = arith.constant 0 : i32
    %c0_i32_1 = arith.constant 0 : i32
    return %c0_i32, %c0_i32_0 : i32, i32
  }
  func.func @transform_4(%arg0: i32) -> (i32, i32) {
    %c0_i32 = arith.constant 0 : i32
    %c0_i32_0 = arith.constant 0 : i32
    %c0_i32_1 = arith.constant 0 : i32
    return %c0_i32, %c0_i32_0 : i32, i32
  }
  func.func @transform_5(%arg0: i32) -> (i32, i32) {
    %c0_i32 = arith.constant 0 : i32
    %c0_i32_0 = arith.constant 0 : i32
    %c0_i32_1 = arith.constant 0 : i32
    return %c0_i32, %c0_i32_0 : i32, i32
  }
  func.func @transform_6(%arg0: i32) -> (i32, i32) {
    %c0_i32 = arith.constant 0 : i32
    %c0_i32_0 = arith.constant 0 : i32
    %c0_i32_1 = arith.constant 0 : i32
    return %c0_i32, %c0_i32_0 : i32, i32
  }
  func.func @transform_7(%arg0: i32) -> (i32, i32) {
    %c0_i32 = arith.constant 0 : i32
    %c0_i32_0 = arith.constant 0 : i32
    %c0_i32_1 = arith.constant 0 : i32
    return %c0_i32, %c0_i32_0 : i32, i32
  }
  func.func @transform_8(%arg0: i32) -> (i32, i32) {
    %c0_i32 = arith.constant 0 : i32
    %c0_i32_0 = arith.constant 0 : i32
    %c0_i32_1 = arith.constant 0 : i32
    return %c0_i32, %c0_i32_0 : i32, i32
  }
  func.func @transform_9(%arg0: i32) -> (i32, i32) {
    %c0_i32 = arith.constant 0 : i32
    %c0_i32_0 = arith.constant 0 : i32
    %c0_i32_1 = arith.constant 0 : i32
    return %c0_i32, %c0_i32_0 : i32, i32
  }
  func.func @transform_10(%arg0: i32) -> (i32, i32) {
    %c0_i32 = arith.constant 0 : i32
    %c0_i32_0 = arith.constant 0 : i32
    %c0_i32_1 = arith.constant 0 : i32
    return %c0_i32, %c0_i32_0 : i32, i32
  }
  func.func @transform_11(%arg0: i32) -> (i32, i32) {
    %c0_i32 = arith.constant 0 : i32
    %c0_i32_0 = arith.constant 0 : i32
    return %arg0, %c0_i32 : i32, i32
  }
}

</mosaic_0001>

<llo_original>
// kernel: tpu_custom_call.1
$region0: #{tpu_custom_call.1}
  #allocation0 [shape = 'u32[]', space=smem, size = 0x4, offset = 0x4, fixed_abs, tag = 'smem constant byte address 0x4 - core index']
  #allocation1 [shape = 'u32[144,128]{1,0:T(1,128)}', space=vmem, size = 0x12000, scoped, tag = 'internal scratch']
  %s0 = inlined_call_operand.vmem [shape: f32[512,10], index: 0, kind: input, shape index: {}]
  %s1 = inlined_call_operand.vmem [shape: bf16[10,48], index: 1, kind: input, shape index: {}]
  %s2 = inlined_call_operand.vmem [shape: f32[1,48], index: 2, kind: input, shape index: {}]
  %s3 = inlined_call_operand.vmem [shape: bf16[48,48], index: 3, kind: input, shape index: {}]
  %s4 = inlined_call_operand.vmem [shape: f32[1,48], index: 4, kind: input, shape index: {}]
  %s5 = inlined_call_operand.vmem [shape: bf16[48,48], index: 5, kind: input, shape index: {}]
  %s6 = inlined_call_operand.vmem [shape: f32[1,48], index: 6, kind: input, shape index: {}]
  %s7 = inlined_call_operand.vmem [shape: bf16[48,48], index: 7, kind: input, shape index: {}]
  %s8 = inlined_call_operand.vmem [shape: f32[1,48], index: 8, kind: input, shape index: {}]
  %s9 = inlined_call_operand.vmem [shape: bf16[48,128], index: 9, kind: input, shape index: {}]
  %s10 = inlined_call_operand.vmem [shape: f32[1,128], index: 10, kind: input, shape index: {}]
  %s11 = inlined_call_operand.hbm [shape: f32[512,128], index: 11, kind: output, shape index: {}]
  %s12 = sld [smem:[#allocation0]]
  $region77: #{tpu_custom_call.1} parent=0
    _
  %s14 = ssub.s32 1, %s12
  %s15 = scalar_select 0, %s14, %s12
  $region1: #{tpu_custom_call.1} parent=0
    #allocation2 [shape = 'u8[262144]{0}', space=vmem, size = 0x40000, scoped, tag = 'output window, operand 0']
    #allocation3 [shape = 's32[2]{0}', space=sflag, size = 0x8, scoped, tag = 'scoped memory for tpu_custom_call.1']
    %16 = vsyncpa [#allocation3], 0
    %s17 = scalar_lea.sflag [#allocation3], 1
    %18 = vsyncpa %s17, 0
    loop: start=0, step=1, limit=4
    $region2: #{tpu_custom_call.1} parent=1 // loop_pre_header
      _
    $region3: #{tpu_custom_call.1} parent=1 // loop_header
      %s20 = sphi 0, %s24
      %p21 = scmp.ge.s32.totalorder %s20, 4
      %s30 = sphi 0, %s32
      %s33 = sphi 0, %s30
      %s34 = sphi 0, %s33
      %s50 = sphi 0, %s34
      %s54 = sphi 0, %s54
      %s56 = sphi 0, %s54
      %s57 = sphi 0, %s56
      %s71 = sphi 0, %s57
      %s75 = sphi 0, %s75
      %s77 = sphi 0, %s75
      %s78 = sphi 0, %s77
      %s92 = sphi 0, %s78
      %s96 = sphi 0, %s96
      %s98 = sphi 0, %s96
      %s99 = sphi 0, %s98
      %s113 = sphi 0, %s99
      %s117 = sphi 0, %s117
      %s119 = sphi 0, %s117
      %s120 = sphi 0, %s119
      %s134 = sphi 0, %s120
      %s138 = sphi 0, %s138
      %s140 = sphi 0, %s138
      %s141 = sphi 0, %s140
      %s155 = sphi 0, %s141
      %s159 = sphi 0, %s159
      %s161 = sphi 0, %s159
      %s162 = sphi 0, %s161
      %s176 = sphi 0, %s162
      %s180 = sphi 0, %s180
      %s182 = sphi 0, %s180
      %s183 = sphi 0, %s182
      %s197 = sphi 0, %s183
      %s201 = sphi 0, %s201
      %s203 = sphi 0, %s201
      %s204 = sphi 0, %s203
      %s218 = sphi 0, %s204
      %s222 = sphi 0, %s222
      %s224 = sphi 0, %s222
      %s225 = sphi 0, %s224
      %s239 = sphi 0, %s225
      %s243 = sphi 0, %s243
      %s245 = sphi 0, %s243
      %s246 = sphi 0, %s245
      %s260 = sphi 0, %s246
      %s266 = sphi 0, %s268
      %s269 = sphi 0, %s266
      %s270 = sphi 0, %s269
      %s286 = sphi 0, %s270
    $region4: #{tpu_custom_call.1} parent=1 // loop_header_branch
      %23 = sbr.rel (%p21) target = $region8
    $region5: #{tpu_custom_call.1} parent=1 // loop_body
      %s25 = ssub.s32 %s20, 1
      %s26 = ssub.s32 %s20, 2
      %s27 = sadd.s32 %s20, 1
      %s28 = ssub.s32 %s20, %s27
      %p29 = scmp.eq.s32.totalorder %s28, 0
      %s31 = sadd.s32 %s30, 1
      %s32 = scalar_select %p29, %s30, %s31
      %p35 = pneg %p29
      %p36 = scmp.eq.s32.totalorder %s20, 1
      %p37 = por %p35, %p36
      %p38 = scmp.ne.s32.totalorder %s30, %s33
      %p39 = scmp.eq.s32.totalorder %s20, 0
      %p40 = por %p38, %p39
      %p41 = scmp.ne.s32.totalorder %s30, %s33
      %p42 = scmp.eq.s32.totalorder %s25, 1
      %p43 = por %p41, %p42
      %p44 = scmp.ne.s32.totalorder %s33, %s34
      %p45 = scmp.eq.s32.totalorder %s25, 0
      %p46 = por %p44, %p45
      %p47 = scmp.ne.s32.totalorder %s33, %s34
      %p48 = scmp.eq.s32.totalorder %s26, 1
      %p49 = por %p47, %p48
      %p51 = scmp.ne.s32.totalorder %s34, %s50
      %p52 = scmp.eq.s32.totalorder %s26, 0
      %p53 = por %p51, %p52
      %s55 = sadd.s32 %s54, 1
      %p58 = scmp.eq.s32.totalorder %s20, 1
      %p59 = scmp.ne.s32.totalorder %s54, %s56
      %p60 = scmp.eq.s32.totalorder %s20, 0
      %p61 = por %p59, %p60
      %p62 = scmp.ne.s32.totalorder %s54, %s56
      %p63 = scmp.eq.s32.totalorder %s25, 1
      %p64 = por %p62, %p63
      %p65 = scmp.ne.s32.totalorder %s56, %s57
      %p66 = scmp.eq.s32.totalorder %s25, 0
      %p67 = por %p65, %p66
      %p68 = scmp.ne.s32.totalorder %s56, %s57
      %p69 = scmp.eq.s32.totalorder %s26, 1
      %p70 = por %p68, %p69
      %p72 = scmp.ne.s32.totalorder %s57, %s71
      %p73 = scmp.eq.s32.totalorder %s26, 0
      %p74 = por %p72, %p73
      %s76 = sadd.s32 %s75, 1
      %p79 = scmp.eq.s32.totalorder %s20, 1
      %p80 = scmp.ne.s32.totalorder %s75, %s77
      %p81 = scmp.eq.s32.totalorder %s20, 0
      %p82 = por %p80, %p81
      %p83 = scmp.ne.s32.totalorder %s75, %s77
      %p84 = scmp.eq.s32.totalorder %s25, 1
      %p85 = por %p83, %p84
      %p86 = scmp.ne.s32.totalorder %s77, %s78
      %p87 = scmp.eq.s32.totalorder %s25, 0
      %p88 = por %p86, %p87
      %p89 = scmp.ne.s32.totalorder %s77, %s78
      %p90 = scmp.eq.s32.totalorder %s26, 1
      %p91 = por %p89, %p90
      %p93 = scmp.ne.s32.totalorder %s78, %s92
      %p94 = scmp.eq.s32.totalorder %s26, 0
      %p95 = por %p93, %p94
      %s97 = sadd.s32 %s96, 1
      %p100 = scmp.eq.s32.totalorder %s20, 1
      %p101 = scmp.ne.s32.totalorder %s96, %s98
      %p102 = scmp.eq.s32.totalorder %s20, 0
      %p103 = por %p101, %p102
      %p104 = scmp.ne.s32.totalorder %s96, %s98
      %p105 = scmp.eq.s32.totalorder %s25, 1
      %p106 = por %p104, %p105
      %p107 = scmp.ne.s32.totalorder %s98, %s99
      %p108 = scmp.eq.s32.totalorder %s25, 0
      %p109 = por %p107, %p108
      %p110 = scmp.ne.s32.totalorder %s98, %s99
      %p111 = scmp.eq.s32.totalorder %s26, 1
      %p112 = por %p110, %p111
      %p114 = scmp.ne.s32.totalorder %s99, %s113
      %p115 = scmp.eq.s32.totalorder %s26, 0
      %p116 = por %p114, %p115
      %s118 = sadd.s32 %s117, 1
      %p121 = scmp.eq.s32.totalorder %s20, 1
      %p122 = scmp.ne.s32.totalorder %s117, %s119
      %p123 = scmp.eq.s32.totalorder %s20, 0
      %p124 = por %p122, %p123
      %p125 = scmp.ne.s32.totalorder %s117, %s119
      %p126 = scmp.eq.s32.totalorder %s25, 1
      %p127 = por %p125, %p126
      %p128 = scmp.ne.s32.totalorder %s119, %s120
      %p129 = scmp.eq.s32.totalorder %s25, 0
      %p130 = por %p128, %p129
      %p131 = scmp.ne.s32.totalorder %s119, %s120
      %p132 = scmp.eq.s32.totalorder %s26, 1
      %p133 = por %p131, %p132
      %p135 = scmp.ne.s32.totalorder %s120, %s134
      %p136 = scmp.eq.s32.totalorder %s26, 0
      %p137 = por %p135, %p136
      %s139 = sadd.s32 %s138, 1
      %p142 = scmp.eq.s32.totalorder %s20, 1
      %p143 = scmp.ne.s32.totalorder %s138, %s140
      %p144 = scmp.eq.s32.totalorder %s20, 0
      %p145 = por %p143, %p144
      %p146 = scmp.ne.s32.totalorder %s138, %s140
      %p147 = scmp.eq.s32.totalorder %s25, 1
      %p148 = por %p146, %p147
      %p149 = scmp.ne.s32.totalorder %s140, %s141
      %p150 = scmp.eq.s32.totalorder %s25, 0
      %p151 = por %p149, %p150
      %p152 = scmp.ne.s32.totalorder %s140, %s141
      %p153 = scmp.eq.s32.totalorder %s26, 1
      %p154 = por %p152, %p153
      %p156 = scmp.ne.s32.totalorder %s141, %s155
      %p157 = scmp.eq.s32.totalorder %s26, 0
      %p158 = por %p156, %p157
      %s160 = sadd.s32 %s159, 1
      %p163 = scmp.eq.s32.totalorder %s20, 1
      %p164 = scmp.ne.s32.totalorder %s159, %s161
      %p165 = scmp.eq.s32.totalorder %s20, 0
      %p166 = por %p164, %p165
      %p167 = scmp.ne.s32.totalorder %s159, %s161
      %p168 = scmp.eq.s32.totalorder %s25, 1
      %p169 = por %p167, %p168
      %p170 = scmp.ne.s32.totalorder %s161, %s162
      %p171 = scmp.eq.s32.totalorder %s25, 0
      %p172 = por %p170, %p171
      %p173 = scmp.ne.s32.totalorder %s161, %s162
      %p174 = scmp.eq.s32.totalorder %s26, 1
      %p175 = por %p173, %p174
      %p177 = scmp.ne.s32.totalorder %s162, %s176
      %p178 = scmp.eq.s32.totalorder %s26, 0
      %p179 = por %p177, %p178
      %s181 = sadd.s32 %s180, 1
      %p184 = scmp.eq.s32.totalorder %s20, 1
      %p185 = scmp.ne.s32.totalorder %s180, %s182
      %p186 = scmp.eq.s32.totalorder %s20, 0
      %p187 = por %p185, %p186
      %p188 = scmp.ne.s32.totalorder %s180, %s182
      %p189 = scmp.eq.s32.totalorder %s25, 1
      %p190 = por %p188, %p189
      %p191 = scmp.ne.s32.totalorder %s182, %s183
      %p192 = scmp.eq.s32.totalorder %s25, 0
      %p193 = por %p191, %p192
      %p194 = scmp.ne.s32.totalorder %s182, %s183
      %p195 = scmp.eq.s32.totalorder %s26, 1
      %p196 = por %p194, %p195
      %p198 = scmp.ne.s32.totalorder %s183, %s197
      %p199 = scmp.eq.s32.totalorder %s26, 0
      %p200 = por %p198, %p199
      %s202 = sadd.s32 %s201, 1
      %p205 = scmp.eq.s32.totalorder %s20, 1
      %p206 = scmp.ne.s32.totalorder %s201, %s203
      %p207 = scmp.eq.s32.totalorder %s20, 0
      %p208 = por %p206, %p207
      %p209 = scmp.ne.s32.totalorder %s201, %s203
      %p210 = scmp.eq.s32.totalorder %s25, 1
      %p211 = por %p209, %p210
      %p212 = scmp.ne.s32.totalorder %s203, %s204
      %p213 = scmp.eq.s32.totalorder %s25, 0
      %p214 = por %p212, %p213
      %p215 = scmp.ne.s32.totalorder %s203, %s204
      %p216 = scmp.eq.s32.totalorder %s26, 1
      %p217 = por %p215, %p216
      %p219 = scmp.ne.s32.totalorder %s204, %s218
      %p220 = scmp.eq.s32.totalorder %s26, 0
      %p221 = por %p219, %p220
      %s223 = sadd.s32 %s222, 1
      %p226 = scmp.eq.s32.totalorder %s20, 1
      %p227 = scmp.ne.s32.totalorder %s222, %s224
      %p228 = scmp.eq.s32.totalorder %s20, 0
      %p229 = por %p227, %p228
      %p230 = scmp.ne.s32.totalorder %s222, %s224
      %p231 = scmp.eq.s32.totalorder %s25, 1
      %p232 = por %p230, %p231
      %p233 = scmp.ne.s32.totalorder %s224, %s225
      %p234 = scmp.eq.s32.totalorder %s25, 0
      %p235 = por %p233, %p234
      %p236 = scmp.ne.s32.totalorder %s224, %s225
      %p237 = scmp.eq.s32.totalorder %s26, 1
      %p238 = por %p236, %p237
      %p240 = scmp.ne.s32.totalorder %s225, %s239
      %p241 = scmp.eq.s32.totalorder %s26, 0
      %p242 = por %p240, %p241
      %s244 = sadd.s32 %s243, 1
      %p247 = scmp.eq.s32.totalorder %s20, 1
      %p248 = scmp.ne.s32.totalorder %s243, %s245
      %p249 = scmp.eq.s32.totalorder %s20, 0
      %p250 = por %p248, %p249
      %p251 = scmp.ne.s32.totalorder %s243, %s245
      %p252 = scmp.eq.s32.totalorder %s25, 1
      %p253 = por %p251, %p252
      %p254 = scmp.ne.s32.totalorder %s245, %s246
      %p255 = scmp.eq.s32.totalorder %s25, 0
      %p256 = por %p254, %p255
      %p257 = scmp.ne.s32.totalorder %s245, %s246
      %p258 = scmp.eq.s32.totalorder %s26, 1
      %p259 = por %p257, %p258
      %p261 = scmp.ne.s32.totalorder %s246, %s260
      %p262 = scmp.eq.s32.totalorder %s26, 0
      %p263 = por %p261, %p262
      %s264 = ssub.s32 %s20, %s27
      %p265 = scmp.eq.s32.totalorder %s264, 0
      %s267 = sadd.s32 %s266, 1
      %s268 = scalar_select %p265, %s266, %s267
      %p271 = pneg %p265
      %p272 = scmp.eq.s32.totalorder %s20, 1
      %p273 = por %p271, %p272
      %p274 = scmp.ne.s32.totalorder %s266, %s269
      %p275 = scmp.eq.s32.totalorder %s20, 0
      %p276 = por %p274, %p275
      %p277 = scmp.ne.s32.totalorder %s266, %s269
      %p278 = scmp.eq.s32.totalorder %s25, 1
      %p279 = por %p277, %p278
      %p280 = scmp.ne.s32.totalorder %s269, %s270
      %p281 = scmp.eq.s32.totalorder %s25, 0
      %p282 = por %p280, %p281
      %p283 = scmp.ne.s32.totalorder %s269, %s270
      %p284 = scmp.eq.s32.totalorder %s26, 1
      %p285 = por %p283, %p284
      %p287 = scmp.ne.s32.totalorder %s270, %s286
      %p288 = scmp.eq.s32.totalorder %s26, 0
      %p289 = por %p287, %p288
      %p290 = scmp.le.s32.totalorder 1, %s20
      %p291 = scmp.lt.s32.totalorder %s20, 3
      %p292 = pnand %p290, %p291
      %p293 = pneg %p292
      // Predicated region
      $region9: #{tpu_custom_call.1} parent=5 // pred_check
        _
      $region10: #{tpu_custom_call.1} parent=5 // pred_check_branch
        %295 = sbr.rel (%p292) target = $region12
      $region11: #{tpu_custom_call.1} parent=5 // pred_region
        %s296 = ssub.s32 %s20, 1
        // Predicated region
        $region13: #{tpu_custom_call.1} parent=11 // pred_check
          %p297 = pneg %p67
        $region14: #{tpu_custom_call.1} parent=11 // pred_check_branch
          %299 = sbr.rel (%p297) target = $region16
        $region15: #{tpu_custom_call.1} parent=11 // pred_region
          _
        $region16: #{tpu_custom_call.1} parent=11 // pred_fallthru
          _
        // Predicated region
        $region17: #{tpu_custom_call.1} parent=11 // pred_check
          %p300 = pneg %p88
        $region18: #{tpu_custom_call.1} parent=11 // pred_check_branch
          %302 = sbr.rel (%p300) target = $region20
        $region19: #{tpu_custom_call.1} parent=11 // pred_region
          _
        $region20: #{tpu_custom_call.1} parent=11 // pred_fallthru
          _
        // Predicated region
        $region21: #{tpu_custom_call.1} parent=11 // pred_check
          %p303 = pneg %p109
        $region22: #{tpu_custom_call.1} parent=11 // pred_check_branch
          %305 = sbr.rel (%p303) target = $region24
        $region23: #{tpu_custom_call.1} parent=11 // pred_region
          _
        $region24: #{tpu_custom_call.1} parent=11 // pred_fallthru
          _
        // Predicated region
        $region25: #{tpu_custom_call.1} parent=11 // pred_check
          %p306 = pneg %p130
        $region26: #{tpu_custom_call.1} parent=11 // pred_check_branch
          %308 = sbr.rel (%p306) target = $region28
        $region27: #{tpu_custom_call.1} parent=11 // pred_region
          _
        $region28: #{tpu_custom_call.1} parent=11 // pred_fallthru
          _
        // Predicated region
        $region29: #{tpu_custom_call.1} parent=11 // pred_check
          %p309 = pneg %p151
        $region30: #{tpu_custom_call.1} parent=11 // pred_check_branch
          %311 = sbr.rel (%p309) target = $region32
        $region31: #{tpu_custom_call.1} parent=11 // pred_region
          _
        $region32: #{tpu_custom_call.1} parent=11 // pred_fallthru
          _
        // Predicated region
        $region33: #{tpu_custom_call.1} parent=11 // pred_check
          %p312 = pneg %p172
        $region34: #{tpu_custom_call.1} parent=11 // pred_check_branch
          %314 = sbr.rel (%p312) target = $region36
        $region35: #{tpu_custom_call.1} parent=11 // pred_region
          _
        $region36: #{tpu_custom_call.1} parent=11 // pred_fallthru
          _
        // Predicated region
        $region37: #{tpu_custom_call.1} parent=11 // pred_check
          %p315 = pneg %p193
        $region38: #{tpu_custom_call.1} parent=11 // pred_check_branch
          %317 = sbr.rel (%p315) target = $region40
        $region39: #{tpu_custom_call.1} parent=11 // pred_region
          _
        $region40: #{tpu_custom_call.1} parent=11 // pred_fallthru
          _
        // Predicated region
        $region41: #{tpu_custom_call.1} parent=11 // pred_check
          %p318 = pneg %p214
        $region42: #{tpu_custom_call.1} parent=11 // pred_check_branch
          %320 = sbr.rel (%p318) target = $region44
        $region43: #{tpu_custom_call.1} parent=11 // pred_region
          _
        $region44: #{tpu_custom_call.1} parent=11 // pred_fallthru
          _
        // Predicated region
        $region45: #{tpu_custom_call.1} parent=11 // pred_check
          %p321 = pneg %p235
        $region46: #{tpu_custom_call.1} parent=11 // pred_check_branch
          %323 = sbr.rel (%p321) target = $region48
        $region47: #{tpu_custom_call.1} parent=11 // pred_region
          _
        $region48: #{tpu_custom_call.1} parent=11 // pred_fallthru
          _
        // Predicated region
        $region49: #{tpu_custom_call.1} parent=11 // pred_check
          %p324 = pneg %p256
        $region50: #{tpu_custom_call.1} parent=11 // pred_check_branch
          %326 = sbr.rel (%p324) target = $region52
        $region51: #{tpu_custom_call.1} parent=11 // pred_region
          _
        $region52: #{tpu_custom_call.1} parent=11 // pred_fallthru
          _
      $region12: #{tpu_custom_call.1} parent=5 // pred_fallthru
        _
      %p327 = scmp.lt.s32.totalorder %s20, 2
      // Predicated region
      $region53: #{tpu_custom_call.1} parent=5 // pred_check
        %p328 = pneg %p327
      $region54: #{tpu_custom_call.1} parent=5 // pred_check_branch
        %330 = sbr.rel (%p328) target = $region56
      $region55: #{tpu_custom_call.1} parent=5 // pred_region
        // Predicated region
        $region57: #{tpu_custom_call.1} parent=55 // pred_check
          %p331 = pneg %p40
        $region58: #{tpu_custom_call.1} parent=55 // pred_check_branch
          %333 = sbr.rel (%p331) target = $region60
        $region59: #{tpu_custom_call.1} parent=55 // pred_region
          %s334 = smul.u32 32, %s20
          %p335 = scmp.lt.s32.totalorder %s334, 63
          %s336 = scalar_select %p335, %s334, 63
          %s337 = smul.addr %s336, 8
          %s338 = scalar_lea.vmem %s0, %s337
          %s339 = smul.u32 32, %s20
        $region60: #{tpu_custom_call.1} parent=55 // pred_fallthru
          _
      $region56: #{tpu_custom_call.1} parent=5 // pred_fallthru
        _
      %p340 = scmp.le.s32.totalorder 1, %s20
      %p341 = scmp.lt.s32.totalorder %s20, 3
      %p342 = pnand %p340, %p341
      %p343 = pneg %p342
      // Predicated region
      $region61: #{tpu_custom_call.1} parent=5 // pred_check
        _
      $region62: #{tpu_custom_call.1} parent=5 // pred_check_branch
        %345 = sbr.rel (%p342) target = $region64
      $region63: #{tpu_custom_call.1} parent=5 // pred_region
        %s346 = ssub.s32 %s20, 1
        %s347 = smul.u32 32, %s25
        %p348 = scmp.lt.s32.totalorder %s347, 63
        %s349 = scalar_select %p348, %s347, 63
        %s350 = smul.addr %s349, 8
        %s351 = scalar_lea.vmem %s0, %s350
        %p352 = pneg %p46
        %p353 = pneg %p43
        %p354 = pneg %p67
        %p355 = pneg %p64
        %p356 = pneg %p88
        %p357 = pneg %p85
        %p358 = pneg %p109
        %p359 = pneg %p106
        %p360 = pneg %p130
        %p361 = pneg %p127
        %p362 = pneg %p151
        %p363 = pneg %p148
        %p364 = pneg %p172
        %p365 = pneg %p169
        %p366 = pneg %p193
        %p367 = pneg %p190
        %p368 = pneg %p214
        %p369 = pneg %p211
        %p370 = pneg %p235
        %p371 = pneg %p232
        %p372 = pneg %p256
        %p373 = pneg %p253
        %p374 = pneg %p282
        %p375 = pneg %p279
        %s376 = sand.u32 %s269, 1
        %s377 = scalar_lea.sflag [#allocation3], %s376
        %s378 = sand.u32 %s269, 1
        %s379 = smul.addr %s378, 256
        %s380 = scalar_lea.vmem [#allocation2], %s379
        %s381 = smul.u32 32, %s25
        %p382 = scmp.lt.s32.totalorder %s381, 63
        %s383 = scalar_select %p382, %s381, 63
        %s384 = smul.addr %s383, 8
        %s385 = scalar_lea.vmem %s0, %s384
        %s386 = smul.u32 32, %s25
        %s387 = smul.u32 32, %s25
        %v389 = vld [vmem:[%s385] sm:$0xff]
        %v390 = vld [vmem:[%s385 + $0x8] sm:$0xff]
        %v391 = vld [vmem:[%s385 + $0x10] sm:$0xff]
        %v392 = vld [vmem:[%s385 + $0x18] sm:$0xff]
        %v393 = vld [vmem:[%s385 + $0x20] sm:$0xff]
        %v394 = vld [vmem:[%s385 + $0x28] sm:$0xff]
        %v395 = vld [vmem:[%s385 + $0x30] sm:$0xff]
        %v396 = vld [vmem:[%s385 + $0x38] sm:$0xff]
        %v397 = vld [vmem:[%s385 + $0x40] sm:$0xff]
        %v398 = vld [vmem:[%s385 + $0x48] sm:$0xff]
        %v399 = vld [vmem:[%s385 + $0x50] sm:$0xff]
        %v400 = vld [vmem:[%s385 + $0x58] sm:$0xff]
        %v401 = vld [vmem:[%s385 + $0x60] sm:$0xff]
        %v402 = vld [vmem:[%s385 + $0x68] sm:$0xff]
        %v403 = vld [vmem:[%s385 + $0x70] sm:$0xff]
        %v404 = vld [vmem:[%s385 + $0x78] sm:$0xff]
        %v405 = vld [vmem:[%s385 + $0x80] sm:$0xff]
        %v406 = vld [vmem:[%s385 + $0x88] sm:$0xff]
        %v407 = vld [vmem:[%s385 + $0x90] sm:$0xff]
        %v408 = vld [vmem:[%s385 + $0x98] sm:$0xff]
        %v409 = vld [vmem:[%s385 + $0xa0] sm:$0xff]
        %v410 = vld [vmem:[%s385 + $0xa8] sm:$0xff]
        %v411 = vld [vmem:[%s385 + $0xb0] sm:$0xff]
        %v412 = vld [vmem:[%s385 + $0xb8] sm:$0xff]
        %v413 = vld [vmem:[%s385 + $0xc0] sm:$0xff]
        %v414 = vld [vmem:[%s385 + $0xc8] sm:$0xff]
        %v415 = vld [vmem:[%s385 + $0xd0] sm:$0xff]
        %v416 = vld [vmem:[%s385 + $0xd8] sm:$0xff]
        %v417 = vld [vmem:[%s385 + $0xe0] sm:$0xff]
        %v418 = vld [vmem:[%s385 + $0xe8] sm:$0xff]
        %v419 = vld [vmem:[%s385 + $0xf0] sm:$0xff]
        %v420 = vld [vmem:[%s385 + $0xf8] sm:$0xff]
        %v421 = vpack.c.bf16 %v390, %v389
        %v422 = vpack.c.bf16 %v392, %v391
        %v423 = vpack.c.bf16 %v394, %v393
        %v424 = vpack.c.bf16 %v396, %v395
        %v425 = vpack.c.bf16 %v398, %v397
        %v426 = vpack.c.bf16 %v400, %v399
        %v427 = vpack.c.bf16 %v402, %v401
        %v428 = vpack.c.bf16 %v404, %v403
        %v429 = vpack.c.bf16 %v406, %v405
        %v430 = vpack.c.bf16 %v408, %v407
        %v431 = vpack.c.bf16 %v410, %v409
        %v432 = vpack.c.bf16 %v412, %v411
        %v433 = vpack.c.bf16 %v414, %v413
        %v434 = vpack.c.bf16 %v416, %v415
        %v435 = vpack.c.bf16 %v418, %v417
        %v436 = vpack.c.bf16 %v420, %v419
        %v437 = vld [vmem:[%s1] sm:$0xf]
        %v438 = vld [vmem:[%s1 + $0x4] sm:$0x1]
        %v439 = vld [vmem:[%s2] sm:$0x1]
        %v441 = vlaneseq
        %v442 = vshrl.u32 %v441, 7
        %v443 = vsub.s32 0, %v442
        %v444 = vrot.slane %v439, %v443
        %v448 = vunpack.c.l.b16 %v437
        %v449 = vunpack.c.l.b16 %v438
        %v450 = vpack.c.b16 %v449, %v448
        %vm451 = vcmask 80896
        %v453 = vsel %vm451, %v421, 0
        %v456 = vsel %vm451, %v422, 0
        %v459 = vsel %vm451, %v423, 0
        %v462 = vsel %vm451, %v424, 0
        %v465 = vsel %vm451, %v425, 0
        %v468 = vsel %vm451, %v426, 0
        %v471 = vsel %vm451, %v427, 0
        %v474 = vsel %vm451, %v428, 0
        %v477 = vsel %vm451, %v429, 0
        %v480 = vsel %vm451, %v430, 0
        %v483 = vsel %vm451, %v431, 0
        %v486 = vsel %vm451, %v432, 0
        %v489 = vsel %vm451, %v433, 0
        %v492 = vsel %vm451, %v434, 0
        %v495 = vsel %vm451, %v435, 0
        %v498 = vsel %vm451, %v436, 0
        %vm500 = vcmask 1044480
        %v502 = vsel %vm500, %v450, 0
        %504 = vmatprep.subr.bf16.mxu0 0
        %505 = vmatpush1.bf16.msra.mxu0 %v502
        %506 = vmatprep.subr.bf16.mxu0 0
        %507 = vmatpush1.bf16.msra.mxu0 0
        %508 = vmatprep.subr.bf16.mxu0 0
        %509 = vmatpush1.bf16.msra.mxu0 0
        %510 = vmatprep.subr.bf16.mxu0 0
        %511 = vmatpush1.bf16.msra.mxu0 0
        %512 = vmatprep.subr.bf16.mxu0 0
        %513 = vmatpush1.bf16.msra.mxu0 0
        %514 = vmatprep.subr.bf16.mxu0 0
        %515 = vmatpush1.bf16.msra.mxu0 0
        %516 = vmatprep.subr.bf16.mxu0 0
        %517 = vmatpush1.bf16.msra.mxu0 0
        %518 = vmatprep.subr.bf16.mxu0 0
        %519 = vmatpush1.bf16.msra.mxu0 0
        %520 = vmatprep.subr.bf16.mxu0 0
        %521 = vmatpush1.bf16.msra.mxu0 0
        %522 = vmatprep.subr.bf16.mxu0 0
        %523 = vmatpush1.bf16.msra.mxu0 0
        %524 = vmatprep.subr.bf16.mxu0 0
        %525 = vmatpush1.bf16.msra.mxu0 0
        %526 = vmatprep.subr.bf16.mxu0 0
        %527 = vmatpush1.bf16.msra.mxu0 0
        %528 = vmatprep.subr.bf16.mxu0 0
        %529 = vmatpush1.bf16.msra.mxu0 0
        %530 = vmatprep.subr.bf16.mxu0 0
        %531 = vmatpush1.bf16.msra.mxu0 0
        %532 = vmatprep.subr.bf16.mxu0 0
        %533 = vmatpush1.bf16.msra.mxu0 0
        %534 = vmatprep.subr.bf16.mxu0 0
        %535 = vmatpush1.bf16.msra.mxu0 0
        %536 = vmatprep.mubr.bf16.mxu0 0
        %537 = vmatmul.mubr.bf16.gmra.mrb[0].mxu0 %v453
        %v538 = vpop.f32.mrb[0].mxu0
        %v539 = vadd.f32 %v444, %v538
        %v540 = vpop.f32.mrb[0].mxu0
        %v541 = vpop.f32.mrb[0].mxu0
        %v542 = vadd.f32 %v444, %v541
        %v543 = vpop.f32.mrb[0].mxu0
        %544 = vmatprep.mubr.bf16.mxu0 0
        %545 = vmatmul.mubr.bf16.gmra.mrb[0].mxu0 %v456
        %v546 = vpop.f32.mrb[0].mxu0
        %v547 = vadd.f32 %v444, %v546
        %v548 = vpop.f32.mrb[0].mxu0
        %v549 = vpop.f32.mrb[0].mxu0
        %v550 = vadd.f32 %v444, %v549
        %v551 = vpop.f32.mrb[0].mxu0
        %552 = vmatprep.mubr.bf16.mxu0 0
        %553 = vmatmul.mubr.bf16.gmra.mrb[0].mxu0 %v459
        %v554 = vpop.f32.mrb[0].mxu0
        %v555 = vadd.f32 %v444, %v554
        %v556 = vpop.f32.mrb[0].mxu0
        %v557 = vpop.f32.mrb[0].mxu0
        %v558 = vadd.f32 %v444, %v557
        %v559 = vpop.f32.mrb[0].mxu0
        %560 = vmatprep.mubr.bf16.mxu0 0
        %561 = vmatmul.mubr.bf16.gmra.mrb[0].mxu0 %v462
        %v562 = vpop.f32.mrb[0].mxu0
        %v563 = vadd.f32 %v444, %v562
        %v564 = vpop.f32.mrb[0].mxu0
        %v565 = vpop.f32.mrb[0].mxu0
        %v566 = vadd.f32 %v444, %v565
        %v567 = vpop.f32.mrb[0].mxu0
        %568 = vmatprep.mubr.bf16.mxu0 0
        %569 = vmatmul.mubr.bf16.gmra.mrb[0].mxu0 %v465
        %v570 = vpop.f32.mrb[0].mxu0
        %v571 = vadd.f32 %v444, %v570
        %v572 = vpop.f32.mrb[0].mxu0
        %v573 = vpop.f32.mrb[0].mxu0
        %v574 = vadd.f32 %v444, %v573
        %v575 = vpop.f32.mrb[0].mxu0
        %576 = vmatprep.mubr.bf16.mxu0 0
        %577 = vmatmul.mubr.bf16.gmra.mrb[0].mxu0 %v468
        %v578 = vpop.f32.mrb[0].mxu0
        %v579 = vadd.f32 %v444, %v578
        %v580 = vpop.f32.mrb[0].mxu0
        %v581 = vpop.f32.mrb[0].mxu0
        %v582 = vadd.f32 %v444, %v581
        %v583 = vpop.f32.mrb[0].mxu0
        %584 = vmatprep.mubr.bf16.mxu0 0
        %585 = vmatmul.mubr.bf16.gmra.mrb[0].mxu0 %v471
        %v586 = vpop.f32.mrb[0].mxu0
        %v587 = vadd.f32 %v444, %v586
        %v588 = vpop.f32.mrb[0].mxu0
        %v589 = vpop.f32.mrb[0].mxu0
        %v590 = vadd.f32 %v444, %v589
        %v591 = vpop.f32.mrb[0].mxu0
        %592 = vmatprep.mubr.bf16.mxu0 0
        %593 = vmatmul.mubr.bf16.gmra.mrb[0].mxu0 %v474
        %v594 = vpop.f32.mrb[0].mxu0
        %v595 = vadd.f32 %v444, %v594
        %v596 = vpop.f32.mrb[0].mxu0
        %v597 = vpop.f32.mrb[0].mxu0
        %v598 = vadd.f32 %v444, %v597
        %v599 = vpop.f32.mrb[0].mxu0
        %600 = vmatprep.mubr.bf16.mxu0 0
        %601 = vmatmul.mubr.bf16.gmra.mrb[0].mxu0 %v477
        %v602 = vpop.f32.mrb[0].mxu0
        %v603 = vadd.f32 %v444, %v602
        %v604 = vpop.f32.mrb[0].mxu0
        %v605 = vpop.f32.mrb[0].mxu0
        %v606 = vadd.f32 %v444, %v605
        %v607 = vpop.f32.mrb[0].mxu0
        %608 = vmatprep.mubr.bf16.mxu0 0
        %609 = vmatmul.mubr.bf16.gmra.mrb[0].mxu0 %v480
        %v610 = vpop.f32.mrb[0].mxu0
        %v611 = vadd.f32 %v444, %v610
        %v612 = vpop.f32.mrb[0].mxu0
        %v613 = vpop.f32.mrb[0].mxu0
        %v614 = vadd.f32 %v444, %v613
        %v615 = vpop.f32.mrb[0].mxu0
        %616 = vmatprep.mubr.bf16.mxu0 0
        %617 = vmatmul.mubr.bf16.gmra.mrb[0].mxu0 %v483
        %v618 = vpop.f32.mrb[0].mxu0
        %v619 = vadd.f32 %v444, %v618
        %v620 = vpop.f32.mrb[0].mxu0
        %v621 = vpop.f32.mrb[0].mxu0
        %v622 = vadd.f32 %v444, %v621
        %v623 = vpop.f32.mrb[0].mxu0
        %624 = vmatprep.mubr.bf16.mxu0 0
        %625 = vmatmul.mubr.bf16.gmra.mrb[0].mxu0 %v486
        %v626 = vpop.f32.mrb[0].mxu0
        %v627 = vadd.f32 %v444, %v626
        %v628 = vpop.f32.mrb[0].mxu0
        %v629 = vpop.f32.mrb[0].mxu0
        %v630 = vadd.f32 %v444, %v629
        %v631 = vpop.f32.mrb[0].mxu0
        %632 = vmatprep.mubr.bf16.mxu0 0
        %633 = vmatmul.mubr.bf16.gmra.mrb[0].mxu0 %v489
        %v634 = vpop.f32.mrb[0].mxu0
        %v635 = vadd.f32 %v444, %v634
        %v636 = vpop.f32.mrb[0].mxu0
        %v637 = vpop.f32.mrb[0].mxu0
        %v638 = vadd.f32 %v444, %v637
        %v639 = vpop.f32.mrb[0].mxu0
        %640 = vmatprep.mubr.bf16.mxu0 0
        %641 = vmatmul.mubr.bf16.gmra.mrb[0].mxu0 %v492
        %v642 = vpop.f32.mrb[0].mxu0
        %v643 = vadd.f32 %v444, %v642
        %v644 = vpop.f32.mrb[0].mxu0
        %v645 = vpop.f32.mrb[0].mxu0
        %v646 = vadd.f32 %v444, %v645
        %v647 = vpop.f32.mrb[0].mxu0
        %648 = vmatprep.mubr.bf16.mxu0 0
        %649 = vmatmul.mubr.bf16.gmra.mrb[0].mxu0 %v495
        %v650 = vpop.f32.mrb[0].mxu0
        %v651 = vadd.f32 %v444, %v650
        %v652 = vpop.f32.mrb[0].mxu0
        %v653 = vpop.f32.mrb[0].mxu0
        %v654 = vadd.f32 %v444, %v653
        %v655 = vpop.f32.mrb[0].mxu0
        %656 = vmatprep.mubr.bf16.mxu0 0
        %657 = vmatmul.mubr.bf16.gmra.mrb[0].mxu0 %v498
        %v658 = vpop.f32.mrb[0].mxu0
        %v659 = vadd.f32 %v444, %v658
        %v660 = vpop.f32.mrb[0].mxu0
        %v661 = vpop.f32.mrb[0].mxu0
        %v662 = vadd.f32 %v444, %v661
        %v663 = vpop.f32.mrb[0].mxu0
        %664 = vdwg.mxu0
        %v665 = vmax.f32 %v539, 0.0
        %v666 = vmax.f32 %v542, 0.0
        %v667 = vmax.f32 %v547, 0.0
        %v668 = vmax.f32 %v550, 0.0
        %v669 = vmax.f32 %v555, 0.0
        %v670 = vmax.f32 %v558, 0.0
        %v671 = vmax.f32 %v563, 0.0
        %v672 = vmax.f32 %v566, 0.0
        %v673 = vmax.f32 %v571, 0.0
        %v674 = vmax.f32 %v574, 0.0
        %v675 = vmax.f32 %v579, 0.0
        %v676 = vmax.f32 %v582, 0.0
        %v677 = vmax.f32 %v587, 0.0
        %v678 = vmax.f32 %v590, 0.0
        %v679 = vmax.f32 %v595, 0.0
        %v680 = vmax.f32 %v598, 0.0
        %v681 = vmax.f32 %v603, 0.0
        %v682 = vmax.f32 %v606, 0.0
        %v683 = vmax.f32 %v611, 0.0
        %v684 = vmax.f32 %v614, 0.0
        %v685 = vmax.f32 %v619, 0.0
        %v686 = vmax.f32 %v622, 0.0
        %v687 = vmax.f32 %v627, 0.0
        %v688 = vmax.f32 %v630, 0.0
        %v689 = vmax.f32 %v635, 0.0
        %v690 = vmax.f32 %v638, 0.0
        %v691 = vmax.f32 %v643, 0.0
        %v692 = vmax.f32 %v646, 0.0
        %v693 = vmax.f32 %v651, 0.0
        %v694 = vmax.f32 %v654, 0.0
        %v695 = vmax.f32 %v659, 0.0
        %v696 = vmax.f32 %v662, 0.0
        %v697 = vpack.c.bf16 %v666, %v665
        %v698 = vpack.c.bf16 %v668, %v667
        %v699 = vpack.c.bf16 %v670, %v669
        %v700 = vpack.c.bf16 %v672, %v671
        %v701 = vpack.c.bf16 %v674, %v673
        %v702 = vpack.c.bf16 %v676, %v675
        %v703 = vpack.c.bf16 %v678, %v677
        %v704 = vpack.c.bf16 %v680, %v679
        %v705 = vpack.c.bf16 %v682, %v681
        %v706 = vpack.c.bf16 %v684, %v683
        %v707 = vpack.c.bf16 %v686, %v685
        %v708 = vpack.c.bf16 %v688, %v687
        %v709 = vpack.c.bf16 %v690, %v689
        %v710 = vpack.c.bf16 %v692, %v691
        %v711 = vpack.c.bf16 %v694, %v693
        %v712 = vpack.c.bf16 %v696, %v695
        %v713 = vld [vmem:[%s3] sm:$0xf]
        %v714 = vld [vmem:[%s3 + $0x4] sm:$0xf]
        %v715 = vld [vmem:[%s3 + $0x8] sm:$0xf]
        %v716 = vld [vmem:[%s3 + $0xc] sm:$0xf]
        %v717 = vld [vmem:[%s3 + $0x10] sm:$0xf]
        %v718 = vld [vmem:[%s3 + $0x14] sm:$0xf]
        %v719 = vld [vmem:[%s4] sm:$0x1]
        %v721 = vlaneseq
        %v722 = vshrl.u32 %v721, 7
        %v723 = vsub.s32 0, %v722
        %v724 = vrot.slane %v719, %v723
        %v732 = vunpack.c.l.b16 %v713
        %v733 = vunpack.c.l.b16 %v714
        %v734 = vunpack.c.l.b16 %v715
        %v735 = vunpack.c.l.b16 %v716
        %v736 = vunpack.c.l.b16 %v717
        %v737 = vunpack.c.l.b16 %v718
        %v738 = vpack.c.b16 %v733, %v732
        %v739 = vpack.c.b16 %v735, %v734
        %v740 = vpack.c.b16 %v737, %v736
        %vm744 = vcmask 392192
        %v746 = vsel %vm744, %v697, 0
        %v749 = vsel %vm744, %v698, 0
        %v752 = vsel %vm744, %v699, 0
        %v755 = vsel %vm744, %v700, 0
        %v758 = vsel %vm744, %v701, 0
        %v761 = vsel %vm744, %v702, 0
        %v764 = vsel %vm744, %v703, 0
        %v767 = vsel %vm744, %v704, 0
        %v770 = vsel %vm744, %v705, 0
        %v773 = vsel %vm744, %v706, 0
        %v776 = vsel %vm744, %v707, 0
        %v779 = vsel %vm744, %v708, 0
        %v782 = vsel %vm744, %v709, 0
        %v785 = vsel %vm744, %v710, 0
        %v788 = vsel %vm744, %v711, 0
        %v791 = vsel %vm744, %v712, 0
        %793 = vmatprep.subr.bf16.mxu0 0
        %794 = vmatpush1.bf16.msra.mxu0 %v738
        %795 = vmatprep.subr.bf16.mxu0 0
        %796 = vmatpush1.bf16.msra.mxu0 %v739
        %797 = vmatprep.subr.bf16.mxu0 0
        %798 = vmatpush1.bf16.msra.mxu0 %v740
        %799 = vmatprep.subr.bf16.mxu0 0
        %800 = vmatpush1.bf16.msra.mxu0 0
        %801 = vmatprep.subr.bf16.mxu0 0
        %802 = vmatpush1.bf16.msra.mxu0 0
        %803 = vmatprep.subr.bf16.mxu0 0
        %804 = vmatpush1.bf16.msra.mxu0 0
        %805 = vmatprep.subr.bf16.mxu0 0
        %806 = vmatpush1.bf16.msra.mxu0 0
        %807 = vmatprep.subr.bf16.mxu0 0
        %808 = vmatpush1.bf16.msra.mxu0 0
        %809 = vmatprep.subr.bf16.mxu0 0
        %810 = vmatpush1.bf16.msra.mxu0 0
        %811 = vmatprep.subr.bf16.mxu0 0
        %812 = vmatpush1.bf16.msra.mxu0 0
        %813 = vmatprep.subr.bf16.mxu0 0
        %814 = vmatpush1.bf16.msra.mxu0 0
        %815 = vmatprep.subr.bf16.mxu0 0
        %816 = vmatpush1.bf16.msra.mxu0 0
        %817 = vmatprep.subr.bf16.mxu0 0
        %818 = vmatpush1.bf16.msra.mxu0 0
        %819 = vmatprep.subr.bf16.mxu0 0
        %820 = vmatpush1.bf16.msra.mxu0 0
        %821 = vmatprep.subr.bf16.mxu0 0
        %822 = vmatpush1.bf16.msra.mxu0 0
        %823 = vmatprep.subr.bf16.mxu0 0
        %824 = vmatpush1.bf16.msra.mxu0 0
        %825 = vmatprep.mubr.bf16.mxu0 0
        %826 = vmatmul.mubr.bf16.gmra.mrb[0].mxu0 %v746
        %v827 = vpop.f32.mrb[0].mxu0
        %v828 = vadd.f32 %v724, %v827
        %v829 = vpop.f32.mrb[0].mxu0
        %v830 = vpop.f32.mrb[0].mxu0
        %v831 = vadd.f32 %v724, %v830
        %v832 = vpop.f32.mrb[0].mxu0
        %833 = vmatprep.mubr.bf16.mxu0 0
        %834 = vmatmul.mubr.bf16.gmra.mrb[0].mxu0 %v749
        %v835 = vpop.f32.mrb[0].mxu0
        %v836 = vadd.f32 %v724, %v835
        %v837 = vpop.f32.mrb[0].mxu0
        %v838 = vpop.f32.mrb[0].mxu0
        %v839 = vadd.f32 %v724, %v838
        %v840 = vpop.f32.mrb[0].mxu0
        %841 = vmatprep.mubr.bf16.mxu0 0
        %842 = vmatmul.mubr.bf16.gmra.mrb[0].mxu0 %v752
        %v843 = vpop.f32.mrb[0].mxu0
        %v844 = vadd.f32 %v724, %v843
        %v845 = vpop.f32.mrb[0].mxu0
        %v846 = vpop.f32.mrb[0].mxu0
        %v847 = vadd.f32 %v724, %v846
        %v848 = vpop.f32.mrb[0].mxu0
        %849 = vmatprep.mubr.bf16.mxu0 0
        %850 = vmatmul.mubr.bf16.gmra.mrb[0].mxu0 %v755
        %v851 = vpop.f32.mrb[0].mxu0
        %v852 = vadd.f32 %v724, %v851
        %v853 = vpop.f32.mrb[0].mxu0
        %v854 = vpop.f32.mrb[0].mxu0
        %v855 = vadd.f32 %v724, %v854
        %v856 = vpop.f32.mrb[0].mxu0
        %857 = vmatprep.mubr.bf16.mxu0 0
        %858 = vmatmul.mubr.bf16.gmra.mrb[0].mxu0 %v758
        %v859 = vpop.f32.mrb[0].mxu0
        %v860 = vadd.f32 %v724, %v859
        %v861 = vpop.f32.mrb[0].mxu0
        %v862 = vpop.f32.mrb[0].mxu0
        %v863 = vadd.f32 %v724, %v862
        %v864 = vpop.f32.mrb[0].mxu0
        %865 = vmatprep.mubr.bf16.mxu0 0
        %866 = vmatmul.mubr.bf16.gmra.mrb[0].mxu0 %v761
        %v867 = vpop.f32.mrb[0].mxu0
        %v868 = vadd.f32 %v724, %v867
        %v869 = vpop.f32.mrb[0].mxu0
        %v870 = vpop.f32.mrb[0].mxu0
        %v871 = vadd.f32 %v724, %v870
        %v872 = vpop.f32.mrb[0].mxu0
        %873 = vmatprep.mubr.bf16.mxu0 0
        %874 = vmatmul.mubr.bf16.gmra.mrb[0].mxu0 %v764
        %v875 = vpop.f32.mrb[0].mxu0
        %v876 = vadd.f32 %v724, %v875
        %v877 = vpop.f32.mrb[0].mxu0
        %v878 = vpop.f32.mrb[0].mxu0
        %v879 = vadd.f32 %v724, %v878
        %v880 = vpop.f32.mrb[0].mxu0
        %881 = vmatprep.mubr.bf16.mxu0 0
        %882 = vmatmul.mubr.bf16.gmra.mrb[0].mxu0 %v767
        %v883 = vpop.f32.mrb[0].mxu0
        %v884 = vadd.f32 %v724, %v883
        %v885 = vpop.f32.mrb[0].mxu0
        %v886 = vpop.f32.mrb[0].mxu0
        %v887 = vadd.f32 %v724, %v886
        %v888 = vpop.f32.mrb[0].mxu0
        %889 = vmatprep.mubr.bf16.mxu0 0
        %890 = vmatmul.mubr.bf16.gmra.mrb[0].mxu0 %v770
        %v891 = vpop.f32.mrb[0].mxu0
        %v892 = vadd.f32 %v724, %v891
        %v893 = vpop.f32.mrb[0].mxu0
        %v894 = vpop.f32.mrb[0].mxu0
        %v895 = vadd.f32 %v724, %v894
        %v896 = vpop.f32.mrb[0].mxu0
        %897 = vmatprep.mubr.bf16.mxu0 0
        %898 = vmatmul.mubr.bf16.gmra.mrb[0].mxu0 %v773
        %v899 = vpop.f32.mrb[0].mxu0
        %v900 = vadd.f32 %v724, %v899
        %v901 = vpop.f32.mrb[0].mxu0
        %v902 = vpop.f32.mrb[0].mxu0
        %v903 = vadd.f32 %v724, %v902
        %v904 = vpop.f32.mrb[0].mxu0
        %905 = vmatprep.mubr.bf16.mxu0 0
        %906 = vmatmul.mubr.bf16.gmra.mrb[0].mxu0 %v776
        %v907 = vpop.f32.mrb[0].mxu0
        %v908 = vadd.f32 %v724, %v907
        %v909 = vpop.f32.mrb[0].mxu0
        %v910 = vpop.f32.mrb[0].mxu0
        %v911 = vadd.f32 %v724, %v910
        %v912 = vpop.f32.mrb[0].mxu0
        %913 = vmatprep.mubr.bf16.mxu0 0
        %914 = vmatmul.mubr.bf16.gmra.mrb[0].mxu0 %v779
        %v915 = vpop.f32.mrb[0].mxu0
        %v916 = vadd.f32 %v724, %v915
        %v917 = vpop.f32.mrb[0].mxu0
        %v918 = vpop.f32.mrb[0].mxu0
        %v919 = vadd.f32 %v724, %v918
        %v920 = vpop.f32.mrb[0].mxu0
        %921 = vmatprep.mubr.bf16.mxu0 0
        %922 = vmatmul.mubr.bf16.gmra.mrb[0].mxu0 %v782
        %v923 = vpop.f32.mrb[0].mxu0
        %v924 = vadd.f32 %v724, %v923
        %v925 = vpop.f32.mrb[0].mxu0
        %v926 = vpop.f32.mrb[0].mxu0
        %v927 = vadd.f32 %v724, %v926
        %v928 = vpop.f32.mrb[0].mxu0
        %929 = vmatprep.mubr.bf16.mxu0 0
        %930 = vmatmul.mubr.bf16.gmra.mrb[0].mxu0 %v785
        %v931 = vpop.f32.mrb[0].mxu0
        %v932 = vadd.f32 %v724, %v931
        %v933 = vpop.f32.mrb[0].mxu0
        %v934 = vpop.f32.mrb[0].mxu0
        %v935 = vadd.f32 %v724, %v934
        %v936 = vpop.f32.mrb[0].mxu0
        %937 = vmatprep.mubr.bf16.mxu0 0
        %938 = vmatmul.mubr.bf16.gmra.mrb[0].mxu0 %v788
        %v939 = vpop.f32.mrb[0].mxu0
        %v940 = vadd.f32 %v724, %v939
        %v941 = vpop.f32.mrb[0].mxu0
        %v942 = vpop.f32.mrb[0].mxu0
        %v943 = vadd.f32 %v724, %v942
        %v944 = vpop.f32.mrb[0].mxu0
        %945 = vmatprep.mubr.bf16.mxu0 0
        %946 = vmatmul.mubr.bf16.gmra.mrb[0].mxu0 %v791
        %v947 = vpop.f32.mrb[0].mxu0
        %v948 = vadd.f32 %v724, %v947
        %v949 = vpop.f32.mrb[0].mxu0
        %v950 = vpop.f32.mrb[0].mxu0
        %v951 = vadd.f32 %v724, %v950
        %v952 = vpop.f32.mrb[0].mxu0
        %953 = vdwg.mxu0
        %v954 = vmax.f32 %v828, 0.0
        %v955 = vmax.f32 %v831, 0.0
        %v956 = vmax.f32 %v836, 0.0
        %v957 = vmax.f32 %v839, 0.0
        %v958 = vmax.f32 %v844, 0.0
        %v959 = vmax.f32 %v847, 0.0
        %v960 = vmax.f32 %v852, 0.0
        %v961 = vmax.f32 %v855, 0.0
        %v962 = vmax.f32 %v860, 0.0
        %v963 = vmax.f32 %v863, 0.0
        %v964 = vmax.f32 %v868, 0.0
        %v965 = vmax.f32 %v871, 0.0
        %v966 = vmax.f32 %v876, 0.0
        %v967 = vmax.f32 %v879, 0.0
        %v968 = vmax.f32 %v884, 0.0
        %v969 = vmax.f32 %v887, 0.0
        %v970 = vmax.f32 %v892, 0.0
        %v971 = vmax.f32 %v895, 0.0
        %v972 = vmax.f32 %v900, 0.0
        %v973 = vmax.f32 %v903, 0.0
        %v974 = vmax.f32 %v908, 0.0
        %v975 = vmax.f32 %v911, 0.0
        %v976 = vmax.f32 %v916, 0.0
        %v977 = vmax.f32 %v919, 0.0
        %v978 = vmax.f32 %v924, 0.0
        %v979 = vmax.f32 %v927, 0.0
        %v980 = vmax.f32 %v932, 0.0
        %v981 = vmax.f32 %v935, 0.0
        %v982 = vmax.f32 %v940, 0.0
        %v983 = vmax.f32 %v943, 0.0
        %v984 = vmax.f32 %v948, 0.0
        %v985 = vmax.f32 %v951, 0.0
        %v986 = vpack.c.bf16 %v955, %v954
        %v987 = vpack.c.bf16 %v957, %v956
        %v988 = vpack.c.bf16 %v959, %v958
        %v989 = vpack.c.bf16 %v961, %v960
        %v990 = vpack.c.bf16 %v963, %v962
        %v991 = vpack.c.bf16 %v965, %v964
        %v992 = vpack.c.bf16 %v967, %v966
        %v993 = vpack.c.bf16 %v969, %v968
        %v994 = vpack.c.bf16 %v971, %v970
        %v995 = vpack.c.bf16 %v973, %v972
        %v996 = vpack.c.bf16 %v975, %v974
        %v997 = vpack.c.bf16 %v977, %v976
        %v998 = vpack.c.bf16 %v979, %v978
        %v999 = vpack.c.bf16 %v981, %v980
        %v1000 = vpack.c.bf16 %v983, %v982
        %v1001 = vpack.c.bf16 %v985, %v984
        %v1002 = vld [vmem:[%s5] sm:$0xf]
        %v1003 = vld [vmem:[%s5 + $0x4] sm:$0xf]
        %v1004 = vld [vmem:[%s5 + $0x8] sm:$0xf]
        %v1005 = vld [vmem:[%s5 + $0xc] sm:$0xf]
        %v1006 = vld [vmem:[%s5 + $0x10] sm:$0xf]
        %v1007 = vld [vmem:[%s5 + $0x14] sm:$0xf]
        %v1008 = vld [vmem:[%s6] sm:$0x1]
        %v1010 = vlaneseq
        %v1011 = vshrl.u32 %v1010, 7
        %v1012 = vsub.s32 0, %v1011
        %v1013 = vrot.slane %v1008, %v1012
        %v1021 = vunpack.c.l.b16 %v1002
        %v1022 = vunpack.c.l.b16 %v1003
        %v1023 = vunpack.c.l.b16 %v1004
        %v1024 = vunpack.c.l.b16 %v1005
        %v1025 = vunpack.c.l.b16 %v1006
        %v1026 = vunpack.c.l.b16 %v1007
        %v1027 = vpack.c.b16 %v1022, %v1021
        %v1028 = vpack.c.b16 %v1024, %v1023
        %v1029 = vpack.c.b16 %v1026, %v1025
        %v1034 = vsel %vm744, %v986, 0
        %v1037 = vsel %vm744, %v987, 0
        %v1040 = vsel %vm744, %v988, 0
        %v1043 = vsel %vm744, %v989, 0
        %v1046 = vsel %vm744, %v990, 0
        %v1049 = vsel %vm744, %v991, 0
        %v1052 = vsel %vm744, %v992, 0
        %v1055 = vsel %vm744, %v993, 0
        %v1058 = vsel %vm744, %v994, 0
        %v1061 = vsel %vm744, %v995, 0
        %v1064 = vsel %vm744, %v996, 0
        %v1067 = vsel %vm744, %v997, 0
        %v1070 = vsel %vm744, %v998, 0
        %v1073 = vsel %vm744, %v999, 0
        %v1076 = vsel %vm744, %v1000, 0
        %v1079 = vsel %vm744, %v1001, 0
        %1081 = vmatprep.subr.bf16.mxu0 0
        %1082 = vmatpush1.bf16.msra.mxu0 %v1027
        %1083 = vmatprep.subr.bf16.mxu0 0
        %1084 = vmatpush1.bf16.msra.mxu0 %v1028
        %1085 = vmatprep.subr.bf16.mxu0 0
        %1086 = vmatpush1.bf16.msra.mxu0 %v1029
        %1087 = vmatprep.subr.bf16.mxu0 0
        %1088 = vmatpush1.bf16.msra.mxu0 0
        %1089 = vmatprep.subr.bf16.mxu0 0
        %1090 = vmatpush1.bf16.msra.mxu0 0
        %1091 = vmatprep.subr.bf16.mxu0 0
        %1092 = vmatpush1.bf16.msra.mxu0 0
        %1093 = vmatprep.subr.bf16.mxu0 0
        %1094 = vmatpush1.bf16.msra.mxu0 0
        %1095 = vmatprep.subr.bf16.mxu0 0
        %1096 = vmatpush1.bf16.msra.mxu0 0
        %1097 = vmatprep.subr.bf16.mxu0 0
        %1098 = vmatpush1.bf16.msra.mxu0 0
        %1099 = vmatprep.subr.bf16.mxu0 0
        %1100 = vmatpush1.bf16.msra.mxu0 0
        %1101 = vmatprep.subr.bf16.mxu0 0
        %1102 = vmatpush1.bf16.msra.mxu0 0
        %1103 = vmatprep.subr.bf16.mxu0 0
        %1104 = vmatpush1.bf16.msra.mxu0 0
        %1105 = vmatprep.subr.bf16.mxu0 0
        %1106 = vmatpush1.bf16.msra.mxu0 0
        %1107 = vmatprep.subr.bf16.mxu0 0
        %1108 = vmatpush1.bf16.msra.mxu0 0
        %1109 = vmatprep.subr.bf16.mxu0 0
        %1110 = vmatpush1.bf16.msra.mxu0 0
        %1111 = vmatprep.subr.bf16.mxu0 0
        %1112 = vmatpush1.bf16.msra.mxu0 0
        %1113 = vmatprep.mubr.bf16.mxu0 0
        %1114 = vmatmul.mubr.bf16.gmra.mrb[0].mxu0 %v1034
        %v1115 = vpop.f32.mrb[0].mxu0
        %v1116 = vadd.f32 %v1013, %v1115
        %v1117 = vpop.f32.mrb[0].mxu0
        %v1118 = vpop.f32.mrb[0].mxu0
        %v1119 = vadd.f32 %v1013, %v1118
        %v1120 = vpop.f32.mrb[0].mxu0
        %1121 = vmatprep.mubr.bf16.mxu0 0
        %1122 = vmatmul.mubr.bf16.gmra.mrb[0].mxu0 %v1037
        %v1123 = vpop.f32.mrb[0].mxu0
        %v1124 = vadd.f32 %v1013, %v1123
        %v1125 = vpop.f32.mrb[0].mxu0
        %v1126 = vpop.f32.mrb[0].mxu0
        %v1127 = vadd.f32 %v1013, %v1126
        %v1128 = vpop.f32.mrb[0].mxu0
        %1129 = vmatprep.mubr.bf16.mxu0 0
        %1130 = vmatmul.mubr.bf16.gmra.mrb[0].mxu0 %v1040
        %v1131 = vpop.f32.mrb[0].mxu0
        %v1132 = vadd.f32 %v1013, %v1131
        %v1133 = vpop.f32.mrb[0].mxu0
        %v1134 = vpop.f32.mrb[0].mxu0
        %v1135 = vadd.f32 %v1013, %v1134
        %v1136 = vpop.f32.mrb[0].mxu0
        %1137 = vmatprep.mubr.bf16.mxu0 0
        %1138 = vmatmul.mubr.bf16.gmra.mrb[0].mxu0 %v1043
        %v1139 = vpop.f32.mrb[0].mxu0
        %v1140 = vadd.f32 %v1013, %v1139
        %v1141 = vpop.f32.mrb[0].mxu0
        %v1142 = vpop.f32.mrb[0].mxu0
        %v1143 = vadd.f32 %v1013, %v1142
        %v1144 = vpop.f32.mrb[0].mxu0
        %1145 = vmatprep.mubr.bf16.mxu0 0
        %1146 = vmatmul.mubr.bf16.gmra.mrb[0].mxu0 %v1046
        %v1147 = vpop.f32.mrb[0].mxu0
        %v1148 = vadd.f32 %v1013, %v1147
        %v1149 = vpop.f32.mrb[0].mxu0
        %v1150 = vpop.f32.mrb[0].mxu0
        %v1151 = vadd.f32 %v1013, %v1150
        %v1152 = vpop.f32.mrb[0].mxu0
        %1153 = vmatprep.mubr.bf16.mxu0 0
        %1154 = vmatmul.mubr.bf16.gmra.mrb[0].mxu0 %v1049
        %v1155 = vpop.f32.mrb[0].mxu0
        %v1156 = vadd.f32 %v1013, %v1155
        %v1157 = vpop.f32.mrb[0].mxu0
        %v1158 = vpop.f32.mrb[0].mxu0
        %v1159 = vadd.f32 %v1013, %v1158
        %v1160 = vpop.f32.mrb[0].mxu0
        %1161 = vmatprep.mubr.bf16.mxu0 0
        %1162 = vmatmul.mubr.bf16.gmra.mrb[0].mxu0 %v1052
        %v1163 = vpop.f32.mrb[0].mxu0
        %v1164 = vadd.f32 %v1013, %v1163
        %v1165 = vpop.f32.mrb[0].mxu0
        %v1166 = vpop.f32.mrb[0].mxu0
        %v1167 = vadd.f32 %v1013, %v1166
        %v1168 = vpop.f32.mrb[0].mxu0
        %1169 = vmatprep.mubr.bf16.mxu0 0
        %1170 = vmatmul.mubr.bf16.gmra.mrb[0].mxu0 %v1055
        %v1171 = vpop.f32.mrb[0].mxu0
        %v1172 = vadd.f32 %v1013, %v1171
        %v1173 = vpop.f32.mrb[0].mxu0
        %v1174 = vpop.f32.mrb[0].mxu0
        %v1175 = vadd.f32 %v1013, %v1174
        %v1176 = vpop.f32.mrb[0].mxu0
        %1177 = vmatprep.mubr.bf16.mxu0 0
        %1178 = vmatmul.mubr.bf16.gmra.mrb[0].mxu0 %v1058
        %v1179 = vpop.f32.mrb[0].mxu0
        %v1180 = vadd.f32 %v1013, %v1179
        %v1181 = vpop.f32.mrb[0].mxu0
        %v1182 = vpop.f32.mrb[0].mxu0
        %v1183 = vadd.f32 %v1013, %v1182
        %v1184 = vpop.f32.mrb[0].mxu0
        %1185 = vmatprep.mubr.bf16.mxu0 0
        %1186 = vmatmul.mubr.bf16.gmra.mrb[0].mxu0 %v1061
        %v1187 = vpop.f32.mrb[0].mxu0
        %v1188 = vadd.f32 %v1013, %v1187
        %v1189 = vpop.f32.mrb[0].mxu0
        %v1190 = vpop.f32.mrb[0].mxu0
        %v1191 = vadd.f32 %v1013, %v1190
        %v1192 = vpop.f32.mrb[0].mxu0
        %1193 = vmatprep.mubr.bf16.mxu0 0
        %1194 = vmatmul.mubr.bf16.gmra.mrb[0].mxu0 %v1064
        %v1195 = vpop.f32.mrb[0].mxu0
        %v1196 = vadd.f32 %v1013, %v1195
        %v1197 = vpop.f32.mrb[0].mxu0
        %v1198 = vpop.f32.mrb[0].mxu0
        %v1199 = vadd.f32 %v1013, %v1198
        %v1200 = vpop.f32.mrb[0].mxu0
        %1201 = vmatprep.mubr.bf16.mxu0 0
        %1202 = vmatmul.mubr.bf16.gmra.mrb[0].mxu0 %v1067
        %v1203 = vpop.f32.mrb[0].mxu0
        %v1204 = vadd.f32 %v1013, %v1203
        %v1205 = vpop.f32.mrb[0].mxu0
        %v1206 = vpop.f32.mrb[0].mxu0
        %v1207 = vadd.f32 %v1013, %v1206
        %v1208 = vpop.f32.mrb[0].mxu0
        %1209 = vmatprep.mubr.bf16.mxu0 0
        %1210 = vmatmul.mubr.bf16.gmra.mrb[0].mxu0 %v1070
        %v1211 = vpop.f32.mrb[0].mxu0
        %v1212 = vadd.f32 %v1013, %v1211
        %v1213 = vpop.f32.mrb[0].mxu0
        %v1214 = vpop.f32.mrb[0].mxu0
        %v1215 = vadd.f32 %v1013, %v1214
        %v1216 = vpop.f32.mrb[0].mxu0
        %1217 = vmatprep.mubr.bf16.mxu0 0
        %1218 = vmatmul.mubr.bf16.gmra.mrb[0].mxu0 %v1073
        %v1219 = vpop.f32.mrb[0].mxu0
        %v1220 = vadd.f32 %v1013, %v1219
        %v1221 = vpop.f32.mrb[0].mxu0
        %v1222 = vpop.f32.mrb[0].mxu0
        %v1223 = vadd.f32 %v1013, %v1222
        %v1224 = vpop.f32.mrb[0].mxu0
        %1225 = vmatprep.mubr.bf16.mxu0 0
        %1226 = vmatmul.mubr.bf16.gmra.mrb[0].mxu0 %v1076
        %v1227 = vpop.f32.mrb[0].mxu0
        %v1228 = vadd.f32 %v1013, %v1227
        %v1229 = vpop.f32.mrb[0].mxu0
        %v1230 = vpop.f32.mrb[0].mxu0
        %v1231 = vadd.f32 %v1013, %v1230
        %v1232 = vpop.f32.mrb[0].mxu0
        %1233 = vmatprep.mubr.bf16.mxu0 0
        %1234 = vmatmul.mubr.bf16.gmra.mrb[0].mxu0 %v1079
        %v1235 = vpop.f32.mrb[0].mxu0
        %v1236 = vadd.f32 %v1013, %v1235
        %v1237 = vpop.f32.mrb[0].mxu0
        %v1238 = vpop.f32.mrb[0].mxu0
        %v1239 = vadd.f32 %v1013, %v1238
        %v1240 = vpop.f32.mrb[0].mxu0
        %1241 = vdwg.mxu0
        %v1242 = vmax.f32 %v1116, 0.0
        %v1243 = vmax.f32 %v1119, 0.0
        %v1244 = vmax.f32 %v1124, 0.0
        %v1245 = vmax.f32 %v1127, 0.0
        %v1246 = vmax.f32 %v1132, 0.0
        %v1247 = vmax.f32 %v1135, 0.0
        %v1248 = vmax.f32 %v1140, 0.0
        %v1249 = vmax.f32 %v1143, 0.0
        %v1250 = vmax.f32 %v1148, 0.0
        %v1251 = vmax.f32 %v1151, 0.0
        %v1252 = vmax.f32 %v1156, 0.0
        %v1253 = vmax.f32 %v1159, 0.0
        %v1254 = vmax.f32 %v1164, 0.0
        %v1255 = vmax.f32 %v1167, 0.0
        %v1256 = vmax.f32 %v1172, 0.0
        %v1257 = vmax.f32 %v1175, 0.0
        %v1258 = vmax.f32 %v1180, 0.0
        %v1259 = vmax.f32 %v1183, 0.0
        %v1260 = vmax.f32 %v1188, 0.0
        %v1261 = vmax.f32 %v1191, 0.0
        %v1262 = vmax.f32 %v1196, 0.0
        %v1263 = vmax.f32 %v1199, 0.0
        %v1264 = vmax.f32 %v1204, 0.0
        %v1265 = vmax.f32 %v1207, 0.0
        %v1266 = vmax.f32 %v1212, 0.0
        %v1267 = vmax.f32 %v1215, 0.0
        %v1268 = vmax.f32 %v1220, 0.0
        %v1269 = vmax.f32 %v1223, 0.0
        %v1270 = vmax.f32 %v1228, 0.0
        %v1271 = vmax.f32 %v1231, 0.0
        %v1272 = vmax.f32 %v1236, 0.0
        %v1273 = vmax.f32 %v1239, 0.0
        %v1274 = vpack.c.bf16 %v1243, %v1242
        %v1275 = vpack.c.bf16 %v1245, %v1244
        %v1276 = vpack.c.bf16 %v1247, %v1246
        %v1277 = vpack.c.bf16 %v1249, %v1248
        %v1278 = vpack.c.bf16 %v1251, %v1250
        %v1279 = vpack.c.bf16 %v1253, %v1252
        %v1280 = vpack.c.bf16 %v1255, %v1254
        %v1281 = vpack.c.bf16 %v1257, %v1256
        %v1282 = vpack.c.bf16 %v1259, %v1258
        %v1283 = vpack.c.bf16 %v1261, %v1260
        %v1284 = vpack.c.bf16 %v1263, %v1262
        %v1285 = vpack.c.bf16 %v1265, %v1264
        %v1286 = vpack.c.bf16 %v1267, %v1266
        %v1287 = vpack.c.bf16 %v1269, %v1268
        %v1288 = vpack.c.bf16 %v1271, %v1270
        %v1289 = vpack.c.bf16 %v1273, %v1272
        %v1290 = vld [vmem:[%s7] sm:$0xf]
        %v1291 = vld [vmem:[%s7 + $0x4] sm:$0xf]
        %v1292 = vld [vmem:[%s7 + $0x8] sm:$0xf]
        %v1293 = vld [vmem:[%s7 + $0xc] sm:$0xf]
        %v1294 = vld [vmem:[%s7 + $0x10] sm:$0xf]
        %v1295 = vld [vmem:[%s7 + $0x14] sm:$0xf]
        %v1296 = vld [vmem:[%s8] sm:$0x1]
        %v1298 = vlaneseq
        %v1299 = vshrl.u32 %v1298, 7
        %v1300 = vsub.s32 0, %v1299
        %v1301 = vrot.slane %v1296, %v1300
        %v1309 = vunpack.c.l.b16 %v1290
        %v1310 = vunpack.c.l.b16 %v1291
        %v1311 = vunpack.c.l.b16 %v1292
        %v1312 = vunpack.c.l.b16 %v1293
        %v1313 = vunpack.c.l.b16 %v1294
        %v1314 = vunpack.c.l.b16 %v1295
        %v1315 = vpack.c.b16 %v1310, %v1309
        %v1316 = vpack.c.b16 %v1312, %v1311
        %v1317 = vpack.c.b16 %v1314, %v1313
        %v1322 = vsel %vm744, %v1274, 0
        %v1325 = vsel %vm744, %v1275, 0
        %v1328 = vsel %vm744, %v1276, 0
        %v1331 = vsel %vm744, %v1277, 0
        %v1334 = vsel %vm744, %v1278, 0
        %v1337 = vsel %vm744, %v1279, 0
        %v1340 = vsel %vm744, %v1280, 0
        %v1343 = vsel %vm744, %v1281, 0
        %v1346 = vsel %vm744, %v1282, 0
        %v1349 = vsel %vm744, %v1283, 0
        %v1352 = vsel %vm744, %v1284, 0
        %v1355 = vsel %vm744, %v1285, 0
        %v1358 = vsel %vm744, %v1286, 0
        %v1361 = vsel %vm744, %v1287, 0
        %v1364 = vsel %vm744, %v1288, 0
        %v1367 = vsel %vm744, %v1289, 0
        %1369 = vmatprep.subr.bf16.mxu0 0
        %1370 = vmatpush1.bf16.msra.mxu0 %v1315
        %1371 = vmatprep.subr.bf16.mxu0 0
        %1372 = vmatpush1.bf16.msra.mxu0 %v1316
        %1373 = vmatprep.subr.bf16.mxu0 0
        %1374 = vmatpush1.bf16.msra.mxu0 %v1317
        %1375 = vmatprep.subr.bf16.mxu0 0
        %1376 = vmatpush1.bf16.msra.mxu0 0
        %1377 = vmatprep.subr.bf16.mxu0 0
        %1378 = vmatpush1.bf16.msra.mxu0 0
        %1379 = vmatprep.subr.bf16.mxu0 0
        %1380 = vmatpush1.bf16.msra.mxu0 0
        %1381 = vmatprep.subr.bf16.mxu0 0
        %1382 = vmatpush1.bf16.msra.mxu0 0
        %1383 = vmatprep.subr.bf16.mxu0 0
        %1384 = vmatpush1.bf16.msra.mxu0 0
        %1385 = vmatprep.subr.bf16.mxu0 0
        %1386 = vmatpush1.bf16.msra.mxu0 0
        %1387 = vmatprep.subr.bf16.mxu0 0
        %1388 = vmatpush1.bf16.msra.mxu0 0
        %1389 = vmatprep.subr.bf16.mxu0 0
        %1390 = vmatpush1.bf16.msra.mxu0 0
        %1391 = vmatprep.subr.bf16.mxu0 0
        %1392 = vmatpush1.bf16.msra.mxu0 0
        %1393 = vmatprep.subr.bf16.mxu0 0
        %1394 = vmatpush1.bf16.msra.mxu0 0
        %1395 = vmatprep.subr.bf16.mxu0 0
        %1396 = vmatpush1.bf16.msra.mxu0 0
        %1397 = vmatprep.subr.bf16.mxu0 0
        %1398 = vmatpush1.bf16.msra.mxu0 0
        %1399 = vmatprep.subr.bf16.mxu0 0
        %1400 = vmatpush1.bf16.msra.mxu0 0
        %1401 = vmatprep.mubr.bf16.mxu0 0
        %1402 = vmatmul.mubr.bf16.gmra.mrb[0].mxu0 %v1322
        %v1403 = vpop.f32.mrb[0].mxu0
        %v1404 = vadd.f32 %v1301, %v1403
        %v1405 = vpop.f32.mrb[0].mxu0
        %v1406 = vpop.f32.mrb[0].mxu0
        %v1407 = vadd.f32 %v1301, %v1406
        %v1408 = vpop.f32.mrb[0].mxu0
        %1409 = vmatprep.mubr.bf16.mxu0 0
        %1410 = vmatmul.mubr.bf16.gmra.mrb[0].mxu0 %v1325
        %v1411 = vpop.f32.mrb[0].mxu0
        %v1412 = vadd.f32 %v1301, %v1411
        %v1413 = vpop.f32.mrb[0].mxu0
        %v1414 = vpop.f32.mrb[0].mxu0
        %v1415 = vadd.f32 %v1301, %v1414
        %v1416 = vpop.f32.mrb[0].mxu0
        %1417 = vmatprep.mubr.bf16.mxu0 0
        %1418 = vmatmul.mubr.bf16.gmra.mrb[0].mxu0 %v1328
        %v1419 = vpop.f32.mrb[0].mxu0
        %v1420 = vadd.f32 %v1301, %v1419
        %v1421 = vpop.f32.mrb[0].mxu0
        %v1422 = vpop.f32.mrb[0].mxu0
        %v1423 = vadd.f32 %v1301, %v1422
        %v1424 = vpop.f32.mrb[0].mxu0
        %1425 = vmatprep.mubr.bf16.mxu0 0
        %1426 = vmatmul.mubr.bf16.gmra.mrb[0].mxu0 %v1331
        %v1427 = vpop.f32.mrb[0].mxu0
        %v1428 = vadd.f32 %v1301, %v1427
        %v1429 = vpop.f32.mrb[0].mxu0
        %v1430 = vpop.f32.mrb[0].mxu0
        %v1431 = vadd.f32 %v1301, %v1430
        %v1432 = vpop.f32.mrb[0].mxu0
        %1433 = vmatprep.mubr.bf16.mxu0 0
        %1434 = vmatmul.mubr.bf16.gmra.mrb[0].mxu0 %v1334
        %v1435 = vpop.f32.mrb[0].mxu0
        %v1436 = vadd.f32 %v1301, %v1435
        %v1437 = vpop.f32.mrb[0].mxu0
        %v1438 = vpop.f32.mrb[0].mxu0
        %v1439 = vadd.f32 %v1301, %v1438
        %v1440 = vpop.f32.mrb[0].mxu0
        %1441 = vmatprep.mubr.bf16.mxu0 0
        %1442 = vmatmul.mubr.bf16.gmra.mrb[0].mxu0 %v1337
        %v1443 = vpop.f32.mrb[0].mxu0
        %v1444 = vadd.f32 %v1301, %v1443
        %v1445 = vpop.f32.mrb[0].mxu0
        %v1446 = vpop.f32.mrb[0].mxu0
        %v1447 = vadd.f32 %v1301, %v1446
        %v1448 = vpop.f32.mrb[0].mxu0
        %1449 = vmatprep.mubr.bf16.mxu0 0
        %1450 = vmatmul.mubr.bf16.gmra.mrb[0].mxu0 %v1340
        %v1451 = vpop.f32.mrb[0].mxu0
        %v1452 = vadd.f32 %v1301, %v1451
        %v1453 = vpop.f32.mrb[0].mxu0
        %v1454 = vpop.f32.mrb[0].mxu0
        %v1455 = vadd.f32 %v1301, %v1454
        %v1456 = vpop.f32.mrb[0].mxu0
        %1457 = vmatprep.mubr.bf16.mxu0 0
        %1458 = vmatmul.mubr.bf16.gmra.mrb[0].mxu0 %v1343
        %v1459 = vpop.f32.mrb[0].mxu0
        %v1460 = vadd.f32 %v1301, %v1459
        %v1461 = vpop.f32.mrb[0].mxu0
        %v1462 = vpop.f32.mrb[0].mxu0
        %v1463 = vadd.f32 %v1301, %v1462
        %v1464 = vpop.f32.mrb[0].mxu0
        %1465 = vmatprep.mubr.bf16.mxu0 0
        %1466 = vmatmul.mubr.bf16.gmra.mrb[0].mxu0 %v1346
        %v1467 = vpop.f32.mrb[0].mxu0
        %v1468 = vadd.f32 %v1301, %v1467
        %v1469 = vpop.f32.mrb[0].mxu0
        %v1470 = vpop.f32.mrb[0].mxu0
        %v1471 = vadd.f32 %v1301, %v1470
        %v1472 = vpop.f32.mrb[0].mxu0
        %1473 = vmatprep.mubr.bf16.mxu0 0
        %1474 = vmatmul.mubr.bf16.gmra.mrb[0].mxu0 %v1349
        %v1475 = vpop.f32.mrb[0].mxu0
        %v1476 = vadd.f32 %v1301, %v1475
        %v1477 = vpop.f32.mrb[0].mxu0
        %v1478 = vpop.f32.mrb[0].mxu0
        %v1479 = vadd.f32 %v1301, %v1478
        %v1480 = vpop.f32.mrb[0].mxu0
        %1481 = vmatprep.mubr.bf16.mxu0 0
        %1482 = vmatmul.mubr.bf16.gmra.mrb[0].mxu0 %v1352
        %v1483 = vpop.f32.mrb[0].mxu0
        %v1484 = vadd.f32 %v1301, %v1483
        %v1485 = vpop.f32.mrb[0].mxu0
        %v1486 = vpop.f32.mrb[0].mxu0
        %v1487 = vadd.f32 %v1301, %v1486
        %v1488 = vpop.f32.mrb[0].mxu0
        %1489 = vmatprep.mubr.bf16.mxu0 0
        %1490 = vmatmul.mubr.bf16.gmra.mrb[0].mxu0 %v1355
        %v1491 = vpop.f32.mrb[0].mxu0
        %v1492 = vadd.f32 %v1301, %v1491
        %v1493 = vpop.f32.mrb[0].mxu0
        %v1494 = vpop.f32.mrb[0].mxu0
        %v1495 = vadd.f32 %v1301, %v1494
        %v1496 = vpop.f32.mrb[0].mxu0
        %1497 = vmatprep.mubr.bf16.mxu0 0
        %1498 = vmatmul.mubr.bf16.gmra.mrb[0].mxu0 %v1358
        %v1499 = vpop.f32.mrb[0].mxu0
        %v1500 = vadd.f32 %v1301, %v1499
        %v1501 = vpop.f32.mrb[0].mxu0
        %v1502 = vpop.f32.mrb[0].mxu0
        %v1503 = vadd.f32 %v1301, %v1502
        %v1504 = vpop.f32.mrb[0].mxu0
        %1505 = vmatprep.mubr.bf16.mxu0 0
        %1506 = vmatmul.mubr.bf16.gmra.mrb[0].mxu0 %v1361
        %v1507 = vpop.f32.mrb[0].mxu0
        %v1508 = vadd.f32 %v1301, %v1507
        %v1509 = vpop.f32.mrb[0].mxu0
        %v1510 = vpop.f32.mrb[0].mxu0
        %v1511 = vadd.f32 %v1301, %v1510
        %v1512 = vpop.f32.mrb[0].mxu0
        %1513 = vmatprep.mubr.bf16.mxu0 0
        %1514 = vmatmul.mubr.bf16.gmra.mrb[0].mxu0 %v1364
        %v1515 = vpop.f32.mrb[0].mxu0
        %v1516 = vadd.f32 %v1301, %v1515
        %v1517 = vpop.f32.mrb[0].mxu0
        %v1518 = vpop.f32.mrb[0].mxu0
        %v1519 = vadd.f32 %v1301, %v1518
        %v1520 = vpop.f32.mrb[0].mxu0
        %1521 = vmatprep.mubr.bf16.mxu0 0
        %1522 = vmatmul.mubr.bf16.gmra.mrb[0].mxu0 %v1367
        %v1523 = vpop.f32.mrb[0].mxu0
        %v1524 = vadd.f32 %v1301, %v1523
        %v1525 = vpop.f32.mrb[0].mxu0
        %v1526 = vpop.f32.mrb[0].mxu0
        %v1527 = vadd.f32 %v1301, %v1526
        %v1528 = vpop.f32.mrb[0].mxu0
        %1529 = vdwg.mxu0
        %v1530 = vmax.f32 %v1404, 0.0
        %v1531 = vmax.f32 %v1407, 0.0
        %v1532 = vmax.f32 %v1412, 0.0
        %v1533 = vmax.f32 %v1415, 0.0
        %v1534 = vmax.f32 %v1420, 0.0
        %v1535 = vmax.f32 %v1423, 0.0
        %v1536 = vmax.f32 %v1428, 0.0
        %v1537 = vmax.f32 %v1431, 0.0
        %v1538 = vmax.f32 %v1436, 0.0
        %v1539 = vmax.f32 %v1439, 0.0
        %v1540 = vmax.f32 %v1444, 0.0
        %v1541 = vmax.f32 %v1447, 0.0
        %v1542 = vmax.f32 %v1452, 0.0
        %v1543 = vmax.f32 %v1455, 0.0
        %v1544 = vmax.f32 %v1460, 0.0
        %v1545 = vmax.f32 %v1463, 0.0
        %v1546 = vmax.f32 %v1468, 0.0
        %v1547 = vmax.f32 %v1471, 0.0
        %v1548 = vmax.f32 %v1476, 0.0
        %v1549 = vmax.f32 %v1479, 0.0
        %v1550 = vmax.f32 %v1484, 0.0
        %v1551 = vmax.f32 %v1487, 0.0
        %v1552 = vmax.f32 %v1492, 0.0
        %v1553 = vmax.f32 %v1495, 0.0
        %v1554 = vmax.f32 %v1500, 0.0
        %v1555 = vmax.f32 %v1503, 0.0
        %v1556 = vmax.f32 %v1508, 0.0
        %v1557 = vmax.f32 %v1511, 0.0
        %v1558 = vmax.f32 %v1516, 0.0
        %v1559 = vmax.f32 %v1519, 0.0
        %v1560 = vmax.f32 %v1524, 0.0
        %v1561 = vmax.f32 %v1527, 0.0
        %v1562 = vpack.c.bf16 %v1531, %v1530
        %v1563 = vpack.c.bf16 %v1533, %v1532
        %v1564 = vpack.c.bf16 %v1535, %v1534
        %v1565 = vpack.c.bf16 %v1537, %v1536
        %v1566 = vpack.c.bf16 %v1539, %v1538
        %v1567 = vpack.c.bf16 %v1541, %v1540
        %v1568 = vpack.c.bf16 %v1543, %v1542
        %v1569 = vpack.c.bf16 %v1545, %v1544
        %v1570 = vpack.c.bf16 %v1547, %v1546
        %v1571 = vpack.c.bf16 %v1549, %v1548
        %v1572 = vpack.c.bf16 %v1551, %v1550
        %v1573 = vpack.c.bf16 %v1553, %v1552
        %v1574 = vpack.c.bf16 %v1555, %v1554
        %v1575 = vpack.c.bf16 %v1557, %v1556
        %v1576 = vpack.c.bf16 %v1559, %v1558
        %v1577 = vpack.c.bf16 %v1561, %v1560
        %v1578 = vld [vmem:[%s9] sm:$0xf]
        %v1579 = vld [vmem:[%s9 + $0x4] sm:$0xf]
        %v1580 = vld [vmem:[%s9 + $0x8] sm:$0xf]
        %v1581 = vld [vmem:[%s9 + $0xc] sm:$0xf]
        %v1582 = vld [vmem:[%s9 + $0x10] sm:$0xf]
        %v1583 = vld [vmem:[%s9 + $0x14] sm:$0xf]
        %v1584 = vld [vmem:[%s10] sm:$0x1]
        %v1586 = vlaneseq
        %v1587 = vshrl.u32 %v1586, 7
        %v1588 = vsub.s32 0, %v1587
        %v1589 = vrot.slane %v1584, %v1588
        %v1597 = vunpack.c.l.b16 %v1578
        %v1598 = vunpack.c.l.b16 %v1579
        %v1599 = vunpack.c.l.b16 %v1580
        %v1600 = vunpack.c.l.b16 %v1581
        %v1601 = vunpack.c.l.b16 %v1582
        %v1602 = vunpack.c.l.b16 %v1583
        %v1603 = vpack.c.b16 %v1598, %v1597
        %v1604 = vpack.c.b16 %v1600, %v1599
        %v1605 = vpack.c.b16 %v1602, %v1601
        %v1610 = vsel %vm744, %v1562, 0
        %v1613 = vsel %vm744, %v1563, 0
        %v1616 = vsel %vm744, %v1564, 0
        %v1619 = vsel %vm744, %v1565, 0
        %v1622 = vsel %vm744, %v1566, 0
        %v1625 = vsel %vm744, %v1567, 0
        %v1628 = vsel %vm744, %v1568, 0
        %v1631 = vsel %vm744, %v1569, 0
        %v1634 = vsel %vm744, %v1570, 0
        %v1637 = vsel %vm744, %v1571, 0
        %v1640 = vsel %vm744, %v1572, 0
        %v1643 = vsel %vm744, %v1573, 0
        %v1646 = vsel %vm744, %v1574, 0
        %v1649 = vsel %vm744, %v1575, 0
        %v1652 = vsel %vm744, %v1576, 0
        %v1655 = vsel %vm744, %v1577, 0
        %1657 = vmatprep.subr.bf16.mxu0 0
        %1658 = vmatpush1.bf16.msra.mxu0 %v1603
        %1659 = vmatprep.subr.bf16.mxu0 0
        %1660 = vmatpush1.bf16.msra.mxu0 %v1604
        %1661 = vmatprep.subr.bf16.mxu0 0
        %1662 = vmatpush1.bf16.msra.mxu0 %v1605
        %1663 = vmatprep.subr.bf16.mxu0 0
        %1664 = vmatpush1.bf16.msra.mxu0 0
        %1665 = vmatprep.subr.bf16.mxu0 0
        %1666 = vmatpush1.bf16.msra.mxu0 0
        %1667 = vmatprep.subr.bf16.mxu0 0
        %1668 = vmatpush1.bf16.msra.mxu0 0
        %1669 = vmatprep.subr.bf16.mxu0 0
        %1670 = vmatpush1.bf16.msra.mxu0 0
        %1671 = vmatprep.subr.bf16.mxu0 0
        %1672 = vmatpush1.bf16.msra.mxu0 0
        %1673 = vmatprep.subr.bf16.mxu0 0
        %1674 = vmatpush1.bf16.msra.mxu0 0
        %1675 = vmatprep.subr.bf16.mxu0 0
        %1676 = vmatpush1.bf16.msra.mxu0 0
        %1677 = vmatprep.subr.bf16.mxu0 0
        %1678 = vmatpush1.bf16.msra.mxu0 0
        %1679 = vmatprep.subr.bf16.mxu0 0
        %1680 = vmatpush1.bf16.msra.mxu0 0
        %1681 = vmatprep.subr.bf16.mxu0 0
        %1682 = vmatpush1.bf16.msra.mxu0 0
        %1683 = vmatprep.subr.bf16.mxu0 0
        %1684 = vmatpush1.bf16.msra.mxu0 0
        %1685 = vmatprep.subr.bf16.mxu0 0
        %1686 = vmatpush1.bf16.msra.mxu0 0
        %1687 = vmatprep.subr.bf16.mxu0 0
        %1688 = vmatpush1.bf16.msra.mxu0 0
        %1689 = vmatprep.mubr.bf16.mxu0 0
        %1690 = vmatmul.mubr.bf16.gmra.mrb[0].mxu0 %v1610
        %v1691 = vpop.f32.mrb[0].mxu0
        %v1692 = vadd.f32 %v1589, %v1691
        %v1693 = vpop.f32.mrb[0].mxu0
        %v1694 = vpop.f32.mrb[0].mxu0
        %v1695 = vadd.f32 %v1589, %v1694
        %v1696 = vpop.f32.mrb[0].mxu0
        %1697 = vmatprep.mubr.bf16.mxu0 0
        %1698 = vmatmul.mubr.bf16.gmra.mrb[0].mxu0 %v1613
        %v1699 = vpop.f32.mrb[0].mxu0
        %v1700 = vadd.f32 %v1589, %v1699
        %v1701 = vpop.f32.mrb[0].mxu0
        %v1702 = vpop.f32.mrb[0].mxu0
        %v1703 = vadd.f32 %v1589, %v1702
        %v1704 = vpop.f32.mrb[0].mxu0
        %1705 = vmatprep.mubr.bf16.mxu0 0
        %1706 = vmatmul.mubr.bf16.gmra.mrb[0].mxu0 %v1616
        %v1707 = vpop.f32.mrb[0].mxu0
        %v1708 = vadd.f32 %v1589, %v1707
        %v1709 = vpop.f32.mrb[0].mxu0
        %v1710 = vpop.f32.mrb[0].mxu0
        %v1711 = vadd.f32 %v1589, %v1710
        %v1712 = vpop.f32.mrb[0].mxu0
        %1713 = vmatprep.mubr.bf16.mxu0 0
        %1714 = vmatmul.mubr.bf16.gmra.mrb[0].mxu0 %v1619
        %v1715 = vpop.f32.mrb[0].mxu0
        %v1716 = vadd.f32 %v1589, %v1715
        %v1717 = vpop.f32.mrb[0].mxu0
        %v1718 = vpop.f32.mrb[0].mxu0
        %v1719 = vadd.f32 %v1589, %v1718
        %v1720 = vpop.f32.mrb[0].mxu0
        %1721 = vmatprep.mubr.bf16.mxu0 0
        %1722 = vmatmul.mubr.bf16.gmra.mrb[0].mxu0 %v1622
        %v1723 = vpop.f32.mrb[0].mxu0
        %v1724 = vadd.f32 %v1589, %v1723
        %v1725 = vpop.f32.mrb[0].mxu0
        %v1726 = vpop.f32.mrb[0].mxu0
        %v1727 = vadd.f32 %v1589, %v1726
        %v1728 = vpop.f32.mrb[0].mxu0
        %1729 = vmatprep.mubr.bf16.mxu0 0
        %1730 = vmatmul.mubr.bf16.gmra.mrb[0].mxu0 %v1625
        %v1731 = vpop.f32.mrb[0].mxu0
        %v1732 = vadd.f32 %v1589, %v1731
        %v1733 = vpop.f32.mrb[0].mxu0
        %v1734 = vpop.f32.mrb[0].mxu0
        %v1735 = vadd.f32 %v1589, %v1734
        %v1736 = vpop.f32.mrb[0].mxu0
        %1737 = vmatprep.mubr.bf16.mxu0 0
        %1738 = vmatmul.mubr.bf16.gmra.mrb[0].mxu0 %v1628
        %v1739 = vpop.f32.mrb[0].mxu0
        %v1740 = vadd.f32 %v1589, %v1739
        %v1741 = vpop.f32.mrb[0].mxu0
        %v1742 = vpop.f32.mrb[0].mxu0
        %v1743 = vadd.f32 %v1589, %v1742
        %v1744 = vpop.f32.mrb[0].mxu0
        %1745 = vmatprep.mubr.bf16.mxu0 0
        %1746 = vmatmul.mubr.bf16.gmra.mrb[0].mxu0 %v1631
        %v1747 = vpop.f32.mrb[0].mxu0
        %v1748 = vadd.f32 %v1589, %v1747
        %v1749 = vpop.f32.mrb[0].mxu0
        %v1750 = vpop.f32.mrb[0].mxu0
        %v1751 = vadd.f32 %v1589, %v1750
        %v1752 = vpop.f32.mrb[0].mxu0
        %1753 = vmatprep.mubr.bf16.mxu0 0
        %1754 = vmatmul.mubr.bf16.gmra.mrb[0].mxu0 %v1634
        %v1755 = vpop.f32.mrb[0].mxu0
        %v1756 = vadd.f32 %v1589, %v1755
        %v1757 = vpop.f32.mrb[0].mxu0
        %v1758 = vpop.f32.mrb[0].mxu0
        %v1759 = vadd.f32 %v1589, %v1758
        %v1760 = vpop.f32.mrb[0].mxu0
        %1761 = vmatprep.mubr.bf16.mxu0 0
        %1762 = vmatmul.mubr.bf16.gmra.mrb[0].mxu0 %v1637
        %v1763 = vpop.f32.mrb[0].mxu0
        %v1764 = vadd.f32 %v1589, %v1763
        %v1765 = vpop.f32.mrb[0].mxu0
        %v1766 = vpop.f32.mrb[0].mxu0
        %v1767 = vadd.f32 %v1589, %v1766
        %v1768 = vpop.f32.mrb[0].mxu0
        %1769 = vmatprep.mubr.bf16.mxu0 0
        %1770 = vmatmul.mubr.bf16.gmra.mrb[0].mxu0 %v1640
        %v1771 = vpop.f32.mrb[0].mxu0
        %v1772 = vadd.f32 %v1589, %v1771
        %v1773 = vpop.f32.mrb[0].mxu0
        %v1774 = vpop.f32.mrb[0].mxu0
        %v1775 = vadd.f32 %v1589, %v1774
        %v1776 = vpop.f32.mrb[0].mxu0
        %1777 = vmatprep.mubr.bf16.mxu0 0
        %1778 = vmatmul.mubr.bf16.gmra.mrb[0].mxu0 %v1643
        %v1779 = vpop.f32.mrb[0].mxu0
        %v1780 = vadd.f32 %v1589, %v1779
        %v1781 = vpop.f32.mrb[0].mxu0
        %v1782 = vpop.f32.mrb[0].mxu0
        %v1783 = vadd.f32 %v1589, %v1782
        %v1784 = vpop.f32.mrb[0].mxu0
        %1785 = vmatprep.mubr.bf16.mxu0 0
        %1786 = vmatmul.mubr.bf16.gmra.mrb[0].mxu0 %v1646
        %v1787 = vpop.f32.mrb[0].mxu0
        %v1788 = vadd.f32 %v1589, %v1787
        %v1789 = vpop.f32.mrb[0].mxu0
        %v1790 = vpop.f32.mrb[0].mxu0
        %v1791 = vadd.f32 %v1589, %v1790
        %v1792 = vpop.f32.mrb[0].mxu0
        %1793 = vmatprep.mubr.bf16.mxu0 0
        %1794 = vmatmul.mubr.bf16.gmra.mrb[0].mxu0 %v1649
        %v1795 = vpop.f32.mrb[0].mxu0
        %v1796 = vadd.f32 %v1589, %v1795
        %v1797 = vpop.f32.mrb[0].mxu0
        %v1798 = vpop.f32.mrb[0].mxu0
        %v1799 = vadd.f32 %v1589, %v1798
        %v1800 = vpop.f32.mrb[0].mxu0
        %1801 = vmatprep.mubr.bf16.mxu0 0
        %1802 = vmatmul.mubr.bf16.gmra.mrb[0].mxu0 %v1652
        %v1803 = vpop.f32.mrb[0].mxu0
        %v1804 = vadd.f32 %v1589, %v1803
        %v1805 = vpop.f32.mrb[0].mxu0
        %v1806 = vpop.f32.mrb[0].mxu0
        %v1807 = vadd.f32 %v1589, %v1806
        %v1808 = vpop.f32.mrb[0].mxu0
        %1809 = vmatprep.mubr.bf16.mxu0 0
        %1810 = vmatmul.mubr.bf16.gmra.mrb[0].mxu0 %v1655
        %v1811 = vpop.f32.mrb[0].mxu0
        %v1812 = vadd.f32 %v1589, %v1811
        %v1813 = vpop.f32.mrb[0].mxu0
        %v1814 = vpop.f32.mrb[0].mxu0
        %v1815 = vadd.f32 %v1589, %v1814
        %v1816 = vpop.f32.mrb[0].mxu0
        %1817 = vdwg.mxu0
        %1818 = vst [vmem:[%s380] sm:$0xff] %v1692
        %1819 = vst [vmem:[%s380 + $0x8] sm:$0xff] %v1695
        %1820 = vst [vmem:[%s380 + $0x10] sm:$0xff] %v1700
        %1821 = vst [vmem:[%s380 + $0x18] sm:$0xff] %v1703
        %1822 = vst [vmem:[%s380 + $0x20] sm:$0xff] %v1708
        %1823 = vst [vmem:[%s380 + $0x28] sm:$0xff] %v1711
        %1824 = vst [vmem:[%s380 + $0x30] sm:$0xff] %v1716
        %1825 = vst [vmem:[%s380 + $0x38] sm:$0xff] %v1719
        %1826 = vst [vmem:[%s380 + $0x40] sm:$0xff] %v1724
        %1827 = vst [vmem:[%s380 + $0x48] sm:$0xff] %v1727
        %1828 = vst [vmem:[%s380 + $0x50] sm:$0xff] %v1732
        %1829 = vst [vmem:[%s380 + $0x58] sm:$0xff] %v1735
        %1830 = vst [vmem:[%s380 + $0x60] sm:$0xff] %v1740
        %1831 = vst [vmem:[%s380 + $0x68] sm:$0xff] %v1743
        %1832 = vst [vmem:[%s380 + $0x70] sm:$0xff] %v1748
        %1833 = vst [vmem:[%s380 + $0x78] sm:$0xff] %v1751
        %1834 = vst [vmem:[%s380 + $0x80] sm:$0xff] %v1756
        %1835 = vst [vmem:[%s380 + $0x88] sm:$0xff] %v1759
        %1836 = vst [vmem:[%s380 + $0x90] sm:$0xff] %v1764
        %1837 = vst [vmem:[%s380 + $0x98] sm:$0xff] %v1767
        %1838 = vst [vmem:[%s380 + $0xa0] sm:$0xff] %v1772
        %1839 = vst [vmem:[%s380 + $0xa8] sm:$0xff] %v1775
        %1840 = vst [vmem:[%s380 + $0xb0] sm:$0xff] %v1780
        %1841 = vst [vmem:[%s380 + $0xb8] sm:$0xff] %v1783
        %1842 = vst [vmem:[%s380 + $0xc0] sm:$0xff] %v1788
        %1843 = vst [vmem:[%s380 + $0xc8] sm:$0xff] %v1791
        %1844 = vst [vmem:[%s380 + $0xd0] sm:$0xff] %v1796
        %1845 = vst [vmem:[%s380 + $0xd8] sm:$0xff] %v1799
        %1846 = vst [vmem:[%s380 + $0xe0] sm:$0xff] %v1804
        %1847 = vst [vmem:[%s380 + $0xe8] sm:$0xff] %v1807
        %1848 = vst [vmem:[%s380 + $0xf0] sm:$0xff] %v1812
        %1849 = vst [vmem:[%s380 + $0xf8] sm:$0xff] %v1815
        %s1850 = sand.u32 %s269, 1
        %s1851 = scalar_lea.sflag [#allocation3], %s1850
        %s1852 = sand.u32 %s269, 1
        %s1853 = smul.addr %s1852, 256
        %s1854 = scalar_lea.vmem [#allocation2], %s1853
        // Predicated region
        $region65: #{tpu_custom_call.1} parent=63 // pred_check
          %p1855 = pneg %p279
        $region66: #{tpu_custom_call.1} parent=63 // pred_check_branch
          %1857 = sbr.rel (%p1855) target = $region68
        $region67: #{tpu_custom_call.1} parent=63 // pred_region
          %s1858 = smul.u32 32, %s25
          %s1860 = ssub.s32 4096, 4096
          %1861 = vsyncadd %s1851, %s1860
          %s1862 = smul.addr %s1858, 128
          %s1863 = scalar_lea.hbm %s11, %s1862
          %s1864 = sshll.u32 %s1854, 4
          %s1865 = int_to_ptr.vmem [resolvable:$true] %s1864
          %1870 = dma.vmem_to_hbm [thread:$0]  %s1865, 4096, %s1863, %s1851, 128, 128, 8
        $region68: #{tpu_custom_call.1} parent=63 // pred_fallthru
          _
      $region64: #{tpu_custom_call.1} parent=5 // pred_fallthru
        _
      %p1871 = scmp.le.s32.totalorder 2, %s20
      // Predicated region
      $region69: #{tpu_custom_call.1} parent=5 // pred_check
        %p1872 = pneg %p1871
      $region70: #{tpu_custom_call.1} parent=5 // pred_check_branch
        %1874 = sbr.rel (%p1872) target = $region72
      $region71: #{tpu_custom_call.1} parent=5 // pred_region
        %s1875 = ssub.s32 %s20, 2
        // Predicated region
        $region73: #{tpu_custom_call.1} parent=71 // pred_check
          %p1876 = pneg %p285
        $region74: #{tpu_custom_call.1} parent=71 // pred_check_branch
          %1878 = sbr.rel (%p1876) target = $region76
        $region75: #{tpu_custom_call.1} parent=71 // pred_region
          %s1879 = sand.u32 %s270, 1
          %s1880 = scalar_lea.sflag [#allocation3], %s1879
          %s1881 = sand.u32 %s270, 1
          %s1882 = smul.addr %s1881, 256
          %s1883 = scalar_lea.vmem [#allocation2], %s1882
          %1884 = dma.done %s1880, 4096
        $region76: #{tpu_custom_call.1} parent=71 // pred_fallthru
          _
      $region72: #{tpu_custom_call.1} parent=5 // pred_fallthru
        _
    $region6: #{tpu_custom_call.1} parent=1 // loop_footer
      %s24 = sadd.s32 1, %s20
    $region7: #{tpu_custom_call.1} parent=1 // loop_footer_branch
      %19 = sbr.rel target = $region3
    $region8: #{tpu_custom_call.1} parent=1 // loop_exit
      _
    %1885 = vsyncpa [#allocation3], 1
    %s1886 = scalar_lea.sflag [#allocation3], 1
    %1887 = vsyncpa %s1886, 1

</llo_original>
